<compile_context>
chip_gen: v6e
topology: v6e:2x2x1
jax: 0.10.0
libtpu: 0.0.40
codegen_flags: <defaults>
</compile_context>

<pallas_src>
import functools

import numpy as np
import jax
import jax.numpy as jnp
from jax.experimental import pallas as pl
from jax.experimental.pallas import tpu as pltpu


def _round_up(v, m):
    return (v + m - 1) // m * m


def _vmem_limit_bytes():
    cap = 64 * 1024 * 1024
    try:
        info = pltpu.get_tpu_info()
        cap = int(getattr(info, "vmem_capacity_bytes", cap))
    except Exception:
        pass
    # Leave headroom for compiler scratch; v5e/v6e -> 64 MiB, v7x -> 48 MiB.
    return min(cap * 3 // 4, 64 * 1024 * 1024)


# ----------------------------------------------------------------------------
# Pass 1: Conv1dReluBn1 -> Res2Conv1dReluBn -> Conv1dReluBn2 (+ SE partial sums)
# ----------------------------------------------------------------------------
def _se_res2_pass1_kernel(
    xc_ref, xe_ref,                            # center tile / halo edges of x
    w1_ref, b1_ref, s1_ref, t1_ref,
    r2w_ref, r2b_ref, r2s_ref, r2t_ref,
    w2_ref, b2_ref, s2_ref, t2_ref,
    h2_ref,                                    # (t_tile, Cout) bf16 (pre-SE-gate)
    psum_ref,                                  # (1, Cout) f32 masked column sums
    slab_ref,                                  # (slab_rows, k*width) bf16 scratch
    spall_ref,                                 # (t_tile, Cout) bf16 staging
    *, seq_len, t_tile, halo, padding, dilation, kernel_size, scale, width,
    cout, shift,
):
    f32 = jnp.float32
    bf16 = jnp.bfloat16
    nums = scale if scale == 1 else scale - 1
    t_ext = t_tile + 2 * halo

    t0 = pl.program_id(1) * t_tile
    # Center rows are always >= 0; only the last tile can run past seq_len.
    c_row = jax.lax.broadcasted_iota(jnp.int32, (t_tile, 1), 0) + t0
    c_in = c_row < seq_len

    # ---- Conv1dReluBn1 (1x1 conv -> ReLU -> folded BN) on center + edges ----
    w1 = w1_ref[...]
    h_c = jnp.dot(xc_ref[...].astype(bf16), w1, preferred_element_type=f32)
    h_c = jnp.maximum(h_c + b1_ref[...], 0.0) * s1_ref[...] + t1_ref[...]

    if halo > 0:
        e_i = jax.lax.broadcasted_iota(jnp.int32, (2 * halo, 1), 0)
        e_row = jnp.where(e_i < halo, t0 - halo + e_i, t0 + t_tile - halo + e_i)
        e_in = jnp.logical_and(e_row >= 0, e_row < seq_len)
        h_e = jnp.dot(xe_ref[...].astype(bf16), w1, preferred_element_type=f32)
        h_e = jnp.maximum(h_e + b1_ref[...], 0.0) * s1_ref[...] + t1_ref[...]

    # ---- Res2Conv1dReluBn: one fused (t_ext, k*w) @ (k*w, w) dot per branch ----
    # Only the never-written rows of the slab read window must be zero (PyTorch
    # zero padding); the written row ranges are identical every grid step, so
    # nothing else needs re-initialization (works under megacore sharding too).
    if padding > 0:
        zband = jnp.zeros((padding, kernel_size * width), bf16)
        slab_ref[shift + padding:shift + 2 * padding, :] = zband
        slab_ref[shift + t_ext:shift + t_ext + padding, :] = zband

    sp = None
    for i in range(nums):
        cs = slice(i * width, (i + 1) * width)
        # Masked conv input z for this branch, assembled piecewise
        # (front halo / center / back halo) so h never has to be concatenated.
        z_c = h_c[:, cs] if i == 0 else sp[halo:halo + t_tile, :] + h_c[:, cs]
        z_c = jnp.where(c_in, z_c, 0.0).astype(bf16)
        if halo > 0:
            z_f = h_e[:halo, cs] if i == 0 else sp[:halo, :] + h_e[:halo, cs]
            z_b = (h_e[halo:, cs] if i == 0
                   else sp[halo + t_tile:, :] + h_e[halo:, cs])
            z_f = jnp.where(e_in[:halo], z_f, 0.0).astype(bf16)
            z_b = jnp.where(e_in[halo:], z_b, 0.0).astype(bf16)
        # Write z at k shifted row offsets; reading rows
        # [shift+padding, shift+padding+t_ext) yields the tap slab whose
        # column block j is the tap-j conv input.
        for j in range(kernel_size):
            off = shift + dilation * (kernel_size - 1 - j)
            col = slice(j * width, (j + 1) * width)
            slab_ref[off + halo:off + halo + t_tile, col] = z_c
            if halo > 0:
                slab_ref[off:off + halo, col] = z_f
                slab_ref[off + halo + t_tile:off + t_ext, col] = z_b
        slab = slab_ref[shift + padding:shift + padding + t_ext, :]
        conv = jnp.dot(slab, r2w_ref[i], preferred_element_type=f32)
        conv = conv + r2b_ref[i:i + 1, :]
        sp = jnp.maximum(conv, 0.0) * r2s_ref[i:i + 1, :] + r2t_ref[i:i + 1, :]
        # Stage this branch's center rows for the single Conv1dReluBn2 matmul.
        spall_ref[:, cs] = sp[halo:halo + t_tile, :].astype(bf16)
    if scale != 1:                                             # bypass chunk
        spall_ref[:, nums * width:cout] = h_c[:, nums * width:cout].astype(bf16)

    # ---- Conv1dReluBn2: ONE deep-K MXU matmul over the staged chunks ----
    h2 = jnp.dot(spall_ref[...], w2_ref[...], preferred_element_type=f32)
    h2 = jnp.maximum(h2 + b2_ref[...], 0.0) * s2_ref[...] + t2_ref[...]
    h2_ref[...] = h2.astype(h2_ref.dtype)

    # ---- SE squeeze: masked per-tile column sums ----
    psum_ref[...] = jnp.sum(jnp.where(c_in, h2, 0.0), axis=0, keepdims=True)


# ----------------------------------------------------------------------------
# Pass 2: channel gate + residual (1x1 shortcut matmul only when Cin != Cout)
# ----------------------------------------------------------------------------
def _se_res2_pass2_kernel(*refs, has_shortcut):
    f32 = jnp.float32
    if has_shortcut:
        x_ref, h2_ref, gate_ref, wsc_ref, bsc_ref, out_ref = refs
    else:
        x_ref, h2_ref, gate_ref, out_ref = refs
    gated = h2_ref[...].astype(f32) * gate_ref[...]            # gate: (1, Cout)
    if has_shortcut:
        res = jnp.dot(x_ref[...].astype(jnp.bfloat16), wsc_ref[...],
                      preferred_element_type=f32) + bsc_ref[...]
    else:
        res = x_ref[...].astype(f32)          # identity shortcut, no matmul
    out_ref[...] = (gated + res).astype(out_ref.dtype)


# ----------------------------------------------------------------------------
# Wrappers
# ----------------------------------------------------------------------------
def se_res2block_forward_tc(x_btc, p, *, kernel_size, dilation, padding, scale,
                            block_t=None, out_dtype=jnp.float32):
    """Channels-last forward: (B, T, C_in) -> (B, T, C_out). Preferred when
    stacking blocks (no per-block transposes)."""
    f32 = jnp.float32
    bf16 = jnp.bfloat16
    B, T, Cin = x_btc.shape
    Cout = p["w1"].shape[1]
    assert Cout % scale == 0
    width = Cout // scale
    nums = scale if scale == 1 else scale - 1
    assert 2 * padding == dilation * (kernel_size - 1), (
        "SE_Res2Block requires a length-preserving Res2 conv")
    has_shortcut = "wsc" in p
    if not has_shortcut:
        assert Cin == Cout

    # ---- time tiling (pass 1) ----
    halo = nums * padding                    # Res2 chain receptive-field radius
    if block_t is None:
        block_t = 512                        # ~85% HBM roofline per tile sweep
    t_tile = max(8, _round_up(min(block_t, _round_up(T, 8)), 8))
    n_t = -(-T // t_tile)
    t_pad = n_t * t_tile
    t_ext = t_tile + 2 * halo
    shift = (-padding) % 16                  # sublane-align the bf16 slab read
    slab_rows = _round_up(shift + 2 * padding + t_ext, 16)

    # ---- operand prep (channels-last; bf16 for every MXU weight operand) ----
    x_p = jnp.pad(x_btc.astype(f32), ((0, 0), (0, t_pad - T), (0, 0)))

    if halo > 0:
        # Tiny halo-edge gather: 2*halo rows per tile (a few % of x) instead of
        # v2's duplicated full-window copy of the input in HBM.
        ts = jnp.arange(n_t)[:, None]
        hs = jnp.arange(halo)[None, :]
        idx = jnp.concatenate([ts * t_tile - halo + hs,
                               (ts + 1) * t_tile + hs], axis=1)   # (n_t, 2h)
        valid = jnp.logical_and(idx >= 0, idx < T)
        x_edges = jnp.take(x_p, jnp.clip(idx, 0, t_pad - 1), axis=1)
        x_edges = jnp.where(valid[None, :, :, None], x_edges, 0.0)
        x_edges = x_edges.reshape(B * n_t, 2 * halo, Cin)
        xe_spec = pl.BlockSpec((None, 2 * halo, Cin),
                               lambda b, t: (b * n_t + t, 0, 0))
    else:
        x_edges = jnp.zeros((1, 1, Cin), f32)            # never read in-kernel
        xe_spec = pl.BlockSpec((None, 1, Cin), lambda b, t: (0, 0, 0))

    w1 = p["w1"].astype(bf16)
    w2 = p["w2"].astype(bf16)
    r2w = p["r2w"].reshape(nums, kernel_size * width, width).astype(bf16)

    cparams = pltpu.CompilerParams(
        dimension_semantics=("parallel", "parallel"),
        vmem_limit_bytes=_vmem_limit_bytes(),
    )
    const2 = lambda b, t: (0, 0)
    const3 = lambda b, t: (0, 0, 0)

    # ---- pass 1 ----
    kern1 = functools.partial(
        _se_res2_pass1_kernel, seq_len=T, t_tile=t_tile, halo=halo,
        padding=padding, dilation=dilation, kernel_size=kernel_size,
        scale=scale, width=width, cout=Cout, shift=shift)
    h2, psum = pl.pallas_call(
        kern1,
        grid=(B, n_t),
        in_specs=[
            pl.BlockSpec((None, t_tile, Cin), lambda b, t: (b, t, 0)),
            xe_spec,
            pl.BlockSpec((Cin, Cout), const2),
            pl.BlockSpec((1, Cout), const2),
            pl.BlockSpec((1, Cout), const2),
            pl.BlockSpec((1, Cout), const2),
            pl.BlockSpec((nums, kernel_size * width, width), const3),
            pl.BlockSpec((nums, width), const2),
            pl.BlockSpec((nums, width), const2),
            pl.BlockSpec((nums, width), const2),
            pl.BlockSpec((Cout, Cout), const2),
            pl.BlockSpec((1, Cout), const2),
            pl.BlockSpec((1, Cout), const2),
            pl.BlockSpec((1, Cout), const2),
        ],
        out_specs=[
            pl.BlockSpec((None, t_tile, Cout), lambda b, t: (b, t, 0)),
            pl.BlockSpec((None, 1, Cout), lambda b, t: (b * n_t + t, 0, 0)),
        ],
        out_shape=(
            jax.ShapeDtypeStruct((B, t_pad, Cout), bf16),
            jax.ShapeDtypeStruct((B * n_t, 1, Cout), f32),
        ),
        scratch_shapes=[
            pltpu.VMEM((slab_rows, kernel_size * width), bf16),
            pltpu.VMEM((t_tile, Cout), bf16),
        ],
        compiler_params=cparams,
    )(x_p, x_edges, w1, p["b1"], p["s1"], p["t1"],
      r2w, p["r2b"], p["r2s"], p["r2t"],
      w2, p["b2"], p["s2"], p["t2"])

    # ---- SE bottleneck MLP on (B, Cout) vectors (tiny; runs in XLA) ----
    mean = psum.reshape(B, n_t, Cout).sum(axis=1) / T
    z = jnp.maximum(mean @ p["se_w1"] + p["se_b1"], 0.0)
    gate = jax.nn.sigmoid(z @ p["se_w2"] + p["se_b2"]).astype(f32)
    gate = gate.reshape(B, 1, Cout)

    # ---- pass 2: gate + residual, with its own (larger, halo-free) tile ----
    bytes_row = Cin * 4 + Cout * 2 + Cout * jnp.dtype(out_dtype).itemsize
    t2_cap = max(t_tile, (8 * 1024 * 1024 // bytes_row) // t_tile * t_tile)
    t2_target = min(2048, t2_cap)
    m = 1
    for cand in range(max(1, min(n_t, t2_target // t_tile)), 0, -1):
        if n_t % cand == 0:
            m = cand
            break
    t2 = m * t_tile
    n_t2 = n_t // m

    kern2 = functools.partial(_se_res2_pass2_kernel, has_shortcut=has_shortcut)
    in_specs2 = [
        pl.BlockSpec((None, t2, Cin), lambda b, t: (b, t, 0)),
        pl.BlockSpec((None, t2, Cout), lambda b, t: (b, t, 0)),
        pl.BlockSpec((None, 1, Cout), lambda b, t: (b, 0, 0)),
    ]
    args2 = [x_p, h2, gate]
    if has_shortcut:
        in_specs2 += [pl.BlockSpec((Cin, Cout), const2),
                      pl.BlockSpec((1, Cout), const2)]
        args2 += [p["wsc"].astype(bf16), p["bsc"].astype(f32)]
    out = pl.pallas_call(
        kern2,
        grid=(B, n_t2),
        in_specs=in_specs2,
        out_specs=pl.BlockSpec((None, t2, Cout), lambda b, t: (b, t, 0)),
        out_shape=jax.ShapeDtypeStruct((B, t_pad, Cout), out_dtype),
        compiler_params=cparams,
    )(*args2)

    return out[:, :T, :]


def se_res2block_forward(x_bct, p, *, kernel_size, dilation, padding, scale,
                         block_t=None, out_dtype=jnp.float32):
    """PyTorch-convention wrapper: x (B, C_in, T) -> (B, C_out, T)."""
    out = se_res2block_forward_tc(
        jnp.transpose(x_bct, (0, 2, 1)), p, kernel_size=kernel_size,
        dilation=dilation, padding=padding, scale=scale, block_t=block_t,
        out_dtype=out_dtype)
    return jnp.transpose(out, (0, 2, 1))


# ----------------------------------------------------------------------------
# Parameters / reference
# ----------------------------------------------------------------------------
def init_params(key, in_channels, out_channels, kernel_size, scale, se_dim):
    """Deterministic synthetic params; BN folded to per-channel scale/shift.
    Matmul weights are rounded to bf16-representable f32 so the f32 reference
    and the bf16-MXU kernel share identical weight values."""
    nums = scale if scale == 1 else scale - 1
    width = out_channels // scale
    eps = 1e-5
    keys = iter(jax.random.split(key, 64))

    def nrm(shape, scl):
        w = jax.random.normal(next(keys), shape, jnp.float32) * scl
        return w.astype(jnp.bfloat16).astype(jnp.float32)

    def bn(c):
        gamma = 1.0 + 0.1 * jax.random.normal(next(keys), (c,), jnp.float32)
        beta = 0.1 * jax.random.normal(next(keys), (c,), jnp.float32)
        mean = 0.1 * jax.random.normal(next(keys), (c,), jnp.float32)
        var = 1.0 + 0.2 * jax.random.uniform(next(keys), (c,), jnp.float32)
        s = gamma / jnp.sqrt(var + eps)
        t = beta - mean * s
        return s[None, :], t[None, :]

    p = {}
    if in_channels != out_channels:                  # shortcut = nn.Conv1d(1x1)
        p["wsc"] = nrm((in_channels, out_channels), 1.0 / np.sqrt(in_channels))
        p["bsc"] = nrm((1, out_channels), 0.05)
    # Conv1dReluBn1 (1x1)
    p["w1"] = nrm((in_channels, out_channels), 1.0 / np.sqrt(in_channels))
    p["b1"] = nrm((1, out_channels), 0.05)
    p["s1"], p["t1"] = bn(out_channels)
    # Res2Conv1dReluBn weights stored as (nums, k, w_in, w_out) (= torch W[:,:,k].T)
    p["r2w"] = nrm((nums, kernel_size, width, width),
                   1.0 / np.sqrt(width * kernel_size))
    p["r2b"] = nrm((nums, width), 0.05)
    ss, ts = [], []
    for _ in range(nums):
        s, t = bn(width)
        ss.append(s)
        ts.append(t)
    p["r2s"] = jnp.concatenate(ss, axis=0)
    p["r2t"] = jnp.concatenate(ts, axis=0)
    # Conv1dReluBn2 (1x1)
    p["w2"] = nrm((out_channels, out_channels), 1.0 / np.sqrt(out_channels))
    p["b2"] = nrm((1, out_channels), 0.05)
    p["s2"], p["t2"] = bn(out_channels)
    # SE_Connect linears (stored transposed vs torch nn.Linear.weight)
    p["se_w1"] = nrm((out_channels, se_dim), 1.0 / np.sqrt(out_channels))
    p["se_b1"] = nrm((1, se_dim), 0.05)
    p["se_w2"] = nrm((se_dim, out_channels), 1.0 / np.sqrt(se_dim))
    p["se_b2"] = nrm((1, out_channels), 0.05)
    return p


def reference_forward(x_bct, p, *, kernel_size, dilation, padding, scale):
    """Pure-JAX f32 reference mirroring the PyTorch forward (inference-mode BN)."""
    x = jnp.transpose(x_bct, (0, 2, 1)).astype(jnp.float32)
    Cout = p["w1"].shape[1]
    width = Cout // scale
    nums = scale if scale == 1 else scale - 1
    T = x.shape[1]

    def one(xb):
        residual = xb @ p["wsc"] + p["bsc"] if "wsc" in p else xb
        h = jnp.maximum(xb @ p["w1"] + p["b1"], 0) * p["s1"] + p["t1"]
        chunks = []
        sp = None
        for i in range(nums):
            blk = h[:, i * width:(i + 1) * width]
            sp = blk if i == 0 else sp + blk
            sp_pad = jnp.pad(sp, ((padding, padding), (0, 0)))
            acc = jnp.broadcast_to(p["r2b"][i:i + 1], (T, width))
            for j in range(kernel_size):
                acc = acc + sp_pad[j * dilation:j * dilation + T] @ p["r2w"][i, j]
            sp = jnp.maximum(acc, 0) * p["r2s"][i:i + 1] + p["r2t"][i:i + 1]
            chunks.append(sp)
        if scale != 1:
            chunks.append(h[:, nums * width:])
        h = jnp.concatenate(chunks, axis=1)
        h = jnp.maximum(h @ p["w2"] + p["b2"], 0) * p["s2"] + p["t2"]
        m = jnp.mean(h, axis=0, keepdims=True)
        z = jnp.maximum(m @ p["se_w1"] + p["se_b1"], 0)
        g = jax.nn.sigmoid(z @ p["se_w2"] + p["se_b2"])
        return h * g + residual

    out = jax.vmap(one)(x)
    return jnp.transpose(out, (0, 2, 1))


if __name__ == "__main__":
    # Config 1: Cin != Cout (real shortcut), block_t=16 -> 2 time tiles, exercises
    #           the halo-edge path and pass-2 re-tiling (t2 = 2 * t_tile).
    # Config 2: Cin == Cout (identity shortcut, no dummy shortcut DMA), T not a
    #           multiple of 8 -> exercises the masked-tail / padded path.
    configs = [
        dict(B=2, Cin=16, Cout=32, T=24, k=3, d=2, pad=2, scale=4, se=16, bt=16),
        dict(B=2, Cin=32, Cout=32, T=20, k=3, d=2, pad=2, scale=4, se=16, bt=None),
    ]
    key = jax.random.PRNGKey(0)
    for cfg in configs:
        key, kx, kp = jax.random.split(key, 3)
        x = jax.random.normal(kx, (cfg["B"], cfg["Cin"], cfg["T"]), jnp.float32)
        params = init_params(kp, cfg["Cin"], cfg["Cout"], cfg["k"],
                             cfg["scale"], cfg["se"])
        out = se_res2block_forward(
            x, params, kernel_size=cfg["k"], dilation=cfg["d"],
            padding=cfg["pad"], scale=cfg["scale"], block_t=cfg["bt"])
        out = jax.block_until_ready(out)
        ref = reference_forward(x, params, kernel_size=cfg["k"], dilation=cfg["d"],
                                padding=cfg["pad"], scale=cfg["scale"])
        # bf16 MXU vs f32 reference -> slightly relaxed tolerance.
        np.testing.assert_allclose(np.asarray(out), np.asarray(ref),
                                   rtol=4e-2, atol=4e-2)
    print("KERNEL_OK")
</pallas_src>

<mosaic_0001>
module attributes {stable_mosaic.version = 11 : i64} {
  func.func @_se_res2_pass1_kernel(%arg0: i32, %arg1: i32, %arg2: memref<1x16x16xf32, #tpu.memory_space<vmem>>, %arg3: memref<1x12x16xf32, #tpu.memory_space<vmem>>, %arg4: memref<16x32xbf16, #tpu.memory_space<vmem>>, %arg5: memref<1x32xf32, #tpu.memory_space<vmem>>, %arg6: memref<1x32xf32, #tpu.memory_space<vmem>>, %arg7: memref<1x32xf32, #tpu.memory_space<vmem>>, %arg8: memref<3x24x8xbf16, #tpu.memory_space<vmem>>, %arg9: memref<3x8xf32, #tpu.memory_space<vmem>>, %arg10: memref<3x8xf32, #tpu.memory_space<vmem>>, %arg11: memref<3x8xf32, #tpu.memory_space<vmem>>, %arg12: memref<32x32xbf16, #tpu.memory_space<vmem>>, %arg13: memref<1x32xf32, #tpu.memory_space<vmem>>, %arg14: memref<1x32xf32, #tpu.memory_space<vmem>>, %arg15: memref<1x32xf32, #tpu.memory_space<vmem>>, %arg16: memref<1x16x32xbf16, #tpu.memory_space<vmem>>, %arg17: memref<1x1x32xf32, #tpu.memory_space<vmem>>, %arg18: memref<48x24xbf16, #tpu.memory_space<vmem>>, %arg19: memref<16x32xbf16, #tpu.memory_space<vmem>>) attributes {dimension_semantics = [#tpu.dimension_semantics<parallel>, #tpu.dimension_semantics<parallel>], iteration_bounds = array<i64: 2, 2>, scalar_prefetch = 0 : i64, scratch_operands = 2 : i64, tpu.core_type = #tpu.core_type<tc>, window_params = [{transform_indices = @transform_0, window_bounds = array<i64: 1, 16, 16>}, {transform_indices = @transform_1, window_bounds = array<i64: 1, 12, 16>}, {pipeline_mode = #tpu.pipeline_mode<synchronous>, transform_indices = @transform_2, window_bounds = array<i64: 16, 32>}, {pipeline_mode = #tpu.pipeline_mode<synchronous>, transform_indices = @transform_3, window_bounds = array<i64: 1, 32>}, {pipeline_mode = #tpu.pipeline_mode<synchronous>, transform_indices = @transform_4, window_bounds = array<i64: 1, 32>}, {pipeline_mode = #tpu.pipeline_mode<synchronous>, transform_indices = @transform_5, window_bounds = array<i64: 1, 32>}, {pipeline_mode = #tpu.pipeline_mode<synchronous>, transform_indices = @transform_6, window_bounds = array<i64: 3, 24, 8>}, {pipeline_mode = #tpu.pipeline_mode<synchronous>, transform_indices = @transform_7, window_bounds = array<i64: 3, 8>}, {pipeline_mode = #tpu.pipeline_mode<synchronous>, transform_indices = @transform_8, window_bounds = array<i64: 3, 8>}, {pipeline_mode = #tpu.pipeline_mode<synchronous>, transform_indices = @transform_9, window_bounds = array<i64: 3, 8>}, {pipeline_mode = #tpu.pipeline_mode<synchronous>, transform_indices = @transform_10, window_bounds = array<i64: 32, 32>}, {pipeline_mode = #tpu.pipeline_mode<synchronous>, transform_indices = @transform_11, window_bounds = array<i64: 1, 32>}, {pipeline_mode = #tpu.pipeline_mode<synchronous>, transform_indices = @transform_12, window_bounds = array<i64: 1, 32>}, {pipeline_mode = #tpu.pipeline_mode<synchronous>, transform_indices = @transform_13, window_bounds = array<i64: 1, 32>}, {transform_indices = @transform_14, window_bounds = array<i64: 1, 16, 32>}, {transform_indices = @transform_15, window_bounds = array<i64: 1, 1, 32>}]} {
    %c16_i32 = arith.constant 16 : i32
    %0 = arith.muli %arg1, %c16_i32 : i32
    %1 = tpu.iota {dimensions = array<i32: 0>} : vector<16x1xi32>
    %2 = vector.broadcast %0 : i32 to vector<16x1xi32>
    %3 = arith.addi %1, %2 : vector<16x1xi32>
    %c24_i32 = arith.constant 24 : i32
    %4 = vector.broadcast %c24_i32 : i32 to vector<16x1xi32>
    %5 = arith.cmpi slt, %3, %4 : vector<16x1xi32>
    %c0 = arith.constant 0 : index
    %c0_0 = arith.constant 0 : index
    %6 = vector.load %arg4[%c0, %c0_0] : memref<16x32xbf16, #tpu.memory_space<vmem>>, vector<16x32xbf16>
    %c0_1 = arith.constant 0 : index
    %c0_2 = arith.constant 0 : index
    %c0_3 = arith.constant 0 : index
    %7 = vector.load %arg2[%c0_1, %c0_2, %c0_3] : memref<1x16x16xf32, #tpu.memory_space<vmem>>, vector<1x16x16xf32>
    %8 = vector.shape_cast %7 : vector<1x16x16xf32> to vector<16x16xf32>
    %9 = arith.truncf %8 : vector<16x16xf32> to vector<16x16xbf16>
    %cst = arith.constant dense<0.000000e+00> : vector<16x32xf32>
    %10 = tpu.matmul %9, %6, %cst {dimension_numbers = #tpu.dot_dimension_numbers<[1], [0], [0], [1], [0, 0, 1, 1], [], []>} : vector<16x16xbf16>, vector<16x32xbf16>, vector<16x32xf32> -> vector<16x32xf32>
    %c0_4 = arith.constant 0 : index
    %c0_5 = arith.constant 0 : index
    %11 = vector.load %arg5[%c0_4, %c0_5] : memref<1x32xf32, #tpu.memory_space<vmem>>, vector<1x32xf32>
    %12 = vector.broadcast %11 : vector<1x32xf32> to vector<16x32xf32>
    %13 = arith.addf %10, %12 : vector<16x32xf32>
    %cst_6 = arith.constant 0.000000e+00 : f32
    %14 = vector.broadcast %cst_6 : f32 to vector<16x32xf32>
    %15 = arith.maximumf %13, %14 : vector<16x32xf32>
    %c0_7 = arith.constant 0 : index
    %c0_8 = arith.constant 0 : index
    %16 = vector.load %arg6[%c0_7, %c0_8] : memref<1x32xf32, #tpu.memory_space<vmem>>, vector<1x32xf32>
    %17 = vector.broadcast %16 : vector<1x32xf32> to vector<16x32xf32>
    %18 = arith.mulf %15, %17 : vector<16x32xf32>
    %c0_9 = arith.constant 0 : index
    %c0_10 = arith.constant 0 : index
    %19 = vector.load %arg7[%c0_9, %c0_10] : memref<1x32xf32, #tpu.memory_space<vmem>>, vector<1x32xf32>
    %20 = vector.broadcast %19 : vector<1x32xf32> to vector<16x32xf32>
    %21 = arith.addf %18, %20 : vector<16x32xf32>
    %22 = tpu.iota {dimensions = array<i32: 0>} : vector<12x1xi32>
    %c6_i32 = arith.constant 6 : i32
    %23 = vector.broadcast %c6_i32 : i32 to vector<12x1xi32>
    %24 = arith.cmpi slt, %22, %23 : vector<12x1xi32>
    %c6_i32_11 = arith.constant 6 : i32
    %25 = arith.subi %0, %c6_i32_11 : i32
    %26 = vector.broadcast %25 : i32 to vector<12x1xi32>
    %27 = arith.addi %26, %22 : vector<12x1xi32>
    %c16_i32_12 = arith.constant 16 : i32
    %28 = arith.addi %0, %c16_i32_12 : i32
    %c6_i32_13 = arith.constant 6 : i32
    %29 = arith.subi %28, %c6_i32_13 : i32
    %30 = vector.broadcast %29 : i32 to vector<12x1xi32>
    %31 = arith.addi %30, %22 : vector<12x1xi32>
    %32 = arith.select %24, %27, %31 : vector<12x1xi1>, vector<12x1xi32>
    %c0_i32 = arith.constant 0 : i32
    %33 = vector.broadcast %c0_i32 : i32 to vector<12x1xi32>
    %34 = arith.cmpi sge, %32, %33 : vector<12x1xi32>
    %c24_i32_14 = arith.constant 24 : i32
    %35 = vector.broadcast %c24_i32_14 : i32 to vector<12x1xi32>
    %36 = arith.cmpi slt, %32, %35 : vector<12x1xi32>
    %37 = arith.andi %34, %36 : vector<12x1xi1>
    %c0_15 = arith.constant 0 : index
    %c0_16 = arith.constant 0 : index
    %c0_17 = arith.constant 0 : index
    %38 = vector.load %arg3[%c0_15, %c0_16, %c0_17] : memref<1x12x16xf32, #tpu.memory_space<vmem>>, vector<1x12x16xf32>
    %39 = vector.shape_cast %38 : vector<1x12x16xf32> to vector<12x16xf32>
    %40 = arith.truncf %39 : vector<12x16xf32> to vector<12x16xbf16>
    %cst_18 = arith.constant dense<0.000000e+00> : vector<12x32xf32>
    %41 = tpu.matmul %40, %6, %cst_18 {dimension_numbers = #tpu.dot_dimension_numbers<[1], [0], [0], [1], [0, 0, 1, 1], [], []>} : vector<12x16xbf16>, vector<16x32xbf16>, vector<12x32xf32> -> vector<12x32xf32>
    %c0_19 = arith.constant 0 : index
    %c0_20 = arith.constant 0 : index
    %42 = vector.load %arg5[%c0_19, %c0_20] : memref<1x32xf32, #tpu.memory_space<vmem>>, vector<1x32xf32>
    %43 = vector.broadcast %42 : vector<1x32xf32> to vector<12x32xf32>
    %44 = arith.addf %41, %43 : vector<12x32xf32>
    %cst_21 = arith.constant 0.000000e+00 : f32
    %45 = vector.broadcast %cst_21 : f32 to vector<12x32xf32>
    %46 = arith.maximumf %44, %45 : vector<12x32xf32>
    %c0_22 = arith.constant 0 : index
    %c0_23 = arith.constant 0 : index
    %47 = vector.load %arg6[%c0_22, %c0_23] : memref<1x32xf32, #tpu.memory_space<vmem>>, vector<1x32xf32>
    %48 = vector.broadcast %47 : vector<1x32xf32> to vector<12x32xf32>
    %49 = arith.mulf %46, %48 : vector<12x32xf32>
    %c0_24 = arith.constant 0 : index
    %c0_25 = arith.constant 0 : index
    %50 = vector.load %arg7[%c0_24, %c0_25] : memref<1x32xf32, #tpu.memory_space<vmem>>, vector<1x32xf32>
    %51 = vector.broadcast %50 : vector<1x32xf32> to vector<12x32xf32>
    %52 = arith.addf %49, %51 : vector<12x32xf32>
    %cst_26 = arith.constant 0.000000e+00 : bf16
    %53 = vector.broadcast %cst_26 : bf16 to vector<2x24xbf16>
    %c16 = arith.constant 16 : index
    %c0_27 = arith.constant 0 : index
    %54 = vector.load %arg18[%c16, %c0_27] : memref<48x24xbf16, #tpu.memory_space<vmem>>, vector<2x24xbf16>
    tpu.vector_store %arg18[%c16, %c0_27], %53 {strides = array<i32>} : memref<48x24xbf16, #tpu.memory_space<vmem>>, vector<2x24xbf16>,
    %c42 = arith.constant 42 : index
    %c0_28 = arith.constant 0 : index
    %55 = vector.load %arg18[%c42, %c0_28] : memref<48x24xbf16, #tpu.memory_space<vmem>>, vector<2x24xbf16>
    tpu.vector_store %arg18[%c42, %c0_28], %53 {strides = array<i32>} : memref<48x24xbf16, #tpu.memory_space<vmem>>, vector<2x24xbf16>,
    %56 = vector.extract_strided_slice %21 {offsets = [0, 0], sizes = [16, 8], strides = [1, 1]} : vector<16x32xf32> to vector<16x8xf32>
    %cst_29 = arith.constant 0.000000e+00 : f32
    %57 = vector.shape_cast %5 : vector<16x1xi1> to vector<16x1xi1>
    %58 = vector.broadcast %57 : vector<16x1xi1> to vector<16x8xi1>
    %59 = vector.broadcast %cst_29 : f32 to vector<16x8xf32>
    %60 = arith.select %58, %56, %59 : vector<16x8xi1>, vector<16x8xf32>
    %61 = arith.truncf %60 : vector<16x8xf32> to vector<16x8xbf16>
    %62 = vector.extract_strided_slice %52 {offsets = [0, 0], sizes = [6, 8], strides = [1, 1]} : vector<12x32xf32> to vector<6x8xf32>
    %63 = vector.extract_strided_slice %52 {offsets = [6, 0], sizes = [6, 8], strides = [1, 1]} : vector<12x32xf32> to vector<6x8xf32>
    %64 = vector.extract_strided_slice %37 {offsets = [0, 0], sizes = [6, 1], strides = [1, 1]} : vector<12x1xi1> to vector<6x1xi1>
    %cst_30 = arith.constant 0.000000e+00 : f32
    %65 = vector.shape_cast %64 : vector<6x1xi1> to vector<6x1xi1>
    %66 = vector.broadcast %65 : vector<6x1xi1> to vector<6x8xi1>
    %67 = vector.broadcast %cst_30 : f32 to vector<6x8xf32>
    %68 = arith.select %66, %62, %67 : vector<6x8xi1>, vector<6x8xf32>
    %69 = arith.truncf %68 : vector<6x8xf32> to vector<6x8xbf16>
    %70 = vector.extract_strided_slice %37 {offsets = [6, 0], sizes = [6, 1], strides = [1, 1]} : vector<12x1xi1> to vector<6x1xi1>
    %cst_31 = arith.constant 0.000000e+00 : f32
    %71 = vector.shape_cast %70 : vector<6x1xi1> to vector<6x1xi1>
    %72 = vector.broadcast %71 : vector<6x1xi1> to vector<6x8xi1>
    %73 = vector.broadcast %cst_31 : f32 to vector<6x8xf32>
    %74 = arith.select %72, %63, %73 : vector<6x8xi1>, vector<6x8xf32>
    %75 = arith.truncf %74 : vector<6x8xf32> to vector<6x8xbf16>
    %c24 = arith.constant 24 : index
    %c0_32 = arith.constant 0 : index
    %76 = vector.load %arg18[%c24, %c0_32] : memref<48x24xbf16, #tpu.memory_space<vmem>>, vector<16x8xbf16>
    tpu.vector_store %arg18[%c24, %c0_32], %61 {strides = array<i32>} : memref<48x24xbf16, #tpu.memory_space<vmem>>, vector<16x8xbf16>,
    %c18 = arith.constant 18 : index
    %c0_33 = arith.constant 0 : index
    %77 = vector.load %arg18[%c18, %c0_33] : memref<48x24xbf16, #tpu.memory_space<vmem>>, vector<6x8xbf16>
    tpu.vector_store %arg18[%c18, %c0_33], %69 {strides = array<i32>} : memref<48x24xbf16, #tpu.memory_space<vmem>>, vector<6x8xbf16>,
    %c40 = arith.constant 40 : index
    %c0_34 = arith.constant 0 : index
    %78 = vector.load %arg18[%c40, %c0_34] : memref<48x24xbf16, #tpu.memory_space<vmem>>, vector<6x8xbf16>
    tpu.vector_store %arg18[%c40, %c0_34], %75 {strides = array<i32>} : memref<48x24xbf16, #tpu.memory_space<vmem>>, vector<6x8xbf16>,
    %c22 = arith.constant 22 : index
    %c8 = arith.constant 8 : index
    %79 = vector.load %arg18[%c22, %c8] : memref<48x24xbf16, #tpu.memory_space<vmem>>, vector<16x8xbf16>
    tpu.vector_store %arg18[%c22, %c8], %61 {strides = array<i32>} : memref<48x24xbf16, #tpu.memory_space<vmem>>, vector<16x8xbf16>,
    %c16_35 = arith.constant 16 : index
    %c8_36 = arith.constant 8 : index
    %80 = vector.load %arg18[%c16_35, %c8_36] : memref<48x24xbf16, #tpu.memory_space<vmem>>, vector<6x8xbf16>
    tpu.vector_store %arg18[%c16_35, %c8_36], %69 {strides = array<i32>} : memref<48x24xbf16, #tpu.memory_space<vmem>>, vector<6x8xbf16>,
    %c38 = arith.constant 38 : index
    %c8_37 = arith.constant 8 : index
    %81 = vector.load %arg18[%c38, %c8_37] : memref<48x24xbf16, #tpu.memory_space<vmem>>, vector<6x8xbf16>
    tpu.vector_store %arg18[%c38, %c8_37], %75 {strides = array<i32>} : memref<48x24xbf16, #tpu.memory_space<vmem>>, vector<6x8xbf16>,
    %c20 = arith.constant 20 : index
    %c16_38 = arith.constant 16 : index
    %82 = vector.load %arg18[%c20, %c16_38] : memref<48x24xbf16, #tpu.memory_space<vmem>>, vector<16x8xbf16>
    tpu.vector_store %arg18[%c20, %c16_38], %61 {strides = array<i32>} : memref<48x24xbf16, #tpu.memory_space<vmem>>, vector<16x8xbf16>,
    %c14 = arith.constant 14 : index
    %c16_39 = arith.constant 16 : index
    %83 = vector.load %arg18[%c14, %c16_39] : memref<48x24xbf16, #tpu.memory_space<vmem>>, vector<6x8xbf16>
    tpu.vector_store %arg18[%c14, %c16_39], %69 {strides = array<i32>} : memref<48x24xbf16, #tpu.memory_space<vmem>>, vector<6x8xbf16>,
    %c36 = arith.constant 36 : index
    %c16_40 = arith.constant 16 : index
    %84 = vector.load %arg18[%c36, %c16_40] : memref<48x24xbf16, #tpu.memory_space<vmem>>, vector<6x8xbf16>
    tpu.vector_store %arg18[%c36, %c16_40], %75 {strides = array<i32>} : memref<48x24xbf16, #tpu.memory_space<vmem>>, vector<6x8xbf16>,
    %c16_41 = arith.constant 16 : index
    %c0_42 = arith.constant 0 : index
    %85 = vector.load %arg18[%c16_41, %c0_42] : memref<48x24xbf16, #tpu.memory_space<vmem>>, vector<28x24xbf16>
    %c0_43 = arith.constant 0 : index
    %c0_44 = arith.constant 0 : index
    %c0_45 = arith.constant 0 : index
    %86 = vector.load %arg8[%c0_43, %c0_44, %c0_45] : memref<3x24x8xbf16, #tpu.memory_space<vmem>>, vector<1x24x8xbf16>
    %87 = vector.shape_cast %86 : vector<1x24x8xbf16> to vector<24x8xbf16>
    %cst_46 = arith.constant dense<0.000000e+00> : vector<28x8xf32>
    %88 = tpu.matmul %85, %87, %cst_46 {dimension_numbers = #tpu.dot_dimension_numbers<[1], [0], [0], [1], [0, 0, 1, 1], [], []>} : vector<28x24xbf16>, vector<24x8xbf16>, vector<28x8xf32> -> vector<28x8xf32>
    %c0_47 = arith.constant 0 : index
    %c0_48 = arith.constant 0 : index
    %89 = vector.load %arg9[%c0_47, %c0_48] : memref<3x8xf32, #tpu.memory_space<vmem>>, vector<1x8xf32>
    %90 = vector.broadcast %89 : vector<1x8xf32> to vector<28x8xf32>
    %91 = arith.addf %88, %90 : vector<28x8xf32>
    %cst_49 = arith.constant 0.000000e+00 : f32
    %92 = vector.broadcast %cst_49 : f32 to vector<28x8xf32>
    %93 = arith.maximumf %91, %92 : vector<28x8xf32>
    %c0_50 = arith.constant 0 : index
    %c0_51 = arith.constant 0 : index
    %94 = vector.load %arg10[%c0_50, %c0_51] : memref<3x8xf32, #tpu.memory_space<vmem>>, vector<1x8xf32>
    %95 = vector.broadcast %94 : vector<1x8xf32> to vector<28x8xf32>
    %96 = arith.mulf %93, %95 : vector<28x8xf32>
    %c0_52 = arith.constant 0 : index
    %c0_53 = arith.constant 0 : index
    %97 = vector.load %arg11[%c0_52, %c0_53] : memref<3x8xf32, #tpu.memory_space<vmem>>, vector<1x8xf32>
    %98 = vector.broadcast %97 : vector<1x8xf32> to vector<28x8xf32>
    %99 = arith.addf %96, %98 : vector<28x8xf32>
    %100 = vector.extract_strided_slice %99 {offsets = [6, 0], sizes = [16, 8], strides = [1, 1]} : vector<28x8xf32> to vector<16x8xf32>
    %101 = arith.truncf %100 : vector<16x8xf32> to vector<16x8xbf16>
    %c0_54 = arith.constant 0 : index
    %c0_55 = arith.constant 0 : index
    %102 = vector.load %arg19[%c0_54, %c0_55] : memref<16x32xbf16, #tpu.memory_space<vmem>>, vector<16x8xbf16>
    tpu.vector_store %arg19[%c0_54, %c0_55], %101 {strides = array<i32>} : memref<16x32xbf16, #tpu.memory_space<vmem>>, vector<16x8xbf16>,
    %103 = vector.extract_strided_slice %99 {offsets = [6, 0], sizes = [16, 8], strides = [1, 1]} : vector<28x8xf32> to vector<16x8xf32>
    %104 = vector.extract_strided_slice %21 {offsets = [0, 8], sizes = [16, 8], strides = [1, 1]} : vector<16x32xf32> to vector<16x8xf32>
    %105 = arith.addf %103, %104 : vector<16x8xf32>
    %cst_56 = arith.constant 0.000000e+00 : f32
    %106 = vector.shape_cast %5 : vector<16x1xi1> to vector<16x1xi1>
    %107 = vector.broadcast %106 : vector<16x1xi1> to vector<16x8xi1>
    %108 = vector.broadcast %cst_56 : f32 to vector<16x8xf32>
    %109 = arith.select %107, %105, %108 : vector<16x8xi1>, vector<16x8xf32>
    %110 = arith.truncf %109 : vector<16x8xf32> to vector<16x8xbf16>
    %111 = vector.extract_strided_slice %99 {offsets = [0, 0], sizes = [6, 8], strides = [1, 1]} : vector<28x8xf32> to vector<6x8xf32>
    %112 = vector.extract_strided_slice %52 {offsets = [0, 8], sizes = [6, 8], strides = [1, 1]} : vector<12x32xf32> to vector<6x8xf32>
    %113 = arith.addf %111, %112 : vector<6x8xf32>
    %114 = vector.extract_strided_slice %99 {offsets = [22, 0], sizes = [6, 8], strides = [1, 1]} : vector<28x8xf32> to vector<6x8xf32>
    %115 = vector.extract_strided_slice %52 {offsets = [6, 8], sizes = [6, 8], strides = [1, 1]} : vector<12x32xf32> to vector<6x8xf32>
    %116 = arith.addf %114, %115 : vector<6x8xf32>
    %117 = vector.extract_strided_slice %37 {offsets = [0, 0], sizes = [6, 1], strides = [1, 1]} : vector<12x1xi1> to vector<6x1xi1>
    %cst_57 = arith.constant 0.000000e+00 : f32
    %118 = vector.shape_cast %117 : vector<6x1xi1> to vector<6x1xi1>
    %119 = vector.broadcast %118 : vector<6x1xi1> to vector<6x8xi1>
    %120 = vector.broadcast %cst_57 : f32 to vector<6x8xf32>
    %121 = arith.select %119, %113, %120 : vector<6x8xi1>, vector<6x8xf32>
    %122 = arith.truncf %121 : vector<6x8xf32> to vector<6x8xbf16>
    %123 = vector.extract_strided_slice %37 {offsets = [6, 0], sizes = [6, 1], strides = [1, 1]} : vector<12x1xi1> to vector<6x1xi1>
    %cst_58 = arith.constant 0.000000e+00 : f32
    %124 = vector.shape_cast %123 : vector<6x1xi1> to vector<6x1xi1>
    %125 = vector.broadcast %124 : vector<6x1xi1> to vector<6x8xi1>
    %126 = vector.broadcast %cst_58 : f32 to vector<6x8xf32>
    %127 = arith.select %125, %116, %126 : vector<6x8xi1>, vector<6x8xf32>
    %128 = arith.truncf %127 : vector<6x8xf32> to vector<6x8xbf16>
    %c24_59 = arith.constant 24 : index
    %c0_60 = arith.constant 0 : index
    %129 = vector.load %arg18[%c24_59, %c0_60] : memref<48x24xbf16, #tpu.memory_space<vmem>>, vector<16x8xbf16>
    tpu.vector_store %arg18[%c24_59, %c0_60], %110 {strides = array<i32>} : memref<48x24xbf16, #tpu.memory_space<vmem>>, vector<16x8xbf16>,
    %c18_61 = arith.constant 18 : index
    %c0_62 = arith.constant 0 : index
    %130 = vector.load %arg18[%c18_61, %c0_62] : memref<48x24xbf16, #tpu.memory_space<vmem>>, vector<6x8xbf16>
    tpu.vector_store %arg18[%c18_61, %c0_62], %122 {strides = array<i32>} : memref<48x24xbf16, #tpu.memory_space<vmem>>, vector<6x8xbf16>,
    %c40_63 = arith.constant 40 : index
    %c0_64 = arith.constant 0 : index
    %131 = vector.load %arg18[%c40_63, %c0_64] : memref<48x24xbf16, #tpu.memory_space<vmem>>, vector<6x8xbf16>
    tpu.vector_store %arg18[%c40_63, %c0_64], %128 {strides = array<i32>} : memref<48x24xbf16, #tpu.memory_space<vmem>>, vector<6x8xbf16>,
    %c22_65 = arith.constant 22 : index
    %c8_66 = arith.constant 8 : index
    %132 = vector.load %arg18[%c22_65, %c8_66] : memref<48x24xbf16, #tpu.memory_space<vmem>>, vector<16x8xbf16>
    tpu.vector_store %arg18[%c22_65, %c8_66], %110 {strides = array<i32>} : memref<48x24xbf16, #tpu.memory_space<vmem>>, vector<16x8xbf16>,
    %c16_67 = arith.constant 16 : index
    %c8_68 = arith.constant 8 : index
    %133 = vector.load %arg18[%c16_67, %c8_68] : memref<48x24xbf16, #tpu.memory_space<vmem>>, vector<6x8xbf16>
    tpu.vector_store %arg18[%c16_67, %c8_68], %122 {strides = array<i32>} : memref<48x24xbf16, #tpu.memory_space<vmem>>, vector<6x8xbf16>,
    %c38_69 = arith.constant 38 : index
    %c8_70 = arith.constant 8 : index
    %134 = vector.load %arg18[%c38_69, %c8_70] : memref<48x24xbf16, #tpu.memory_space<vmem>>, vector<6x8xbf16>
    tpu.vector_store %arg18[%c38_69, %c8_70], %128 {strides = array<i32>} : memref<48x24xbf16, #tpu.memory_space<vmem>>, vector<6x8xbf16>,
    %c20_71 = arith.constant 20 : index
    %c16_72 = arith.constant 16 : index
    %135 = vector.load %arg18[%c20_71, %c16_72] : memref<48x24xbf16, #tpu.memory_space<vmem>>, vector<16x8xbf16>
    tpu.vector_store %arg18[%c20_71, %c16_72], %110 {strides = array<i32>} : memref<48x24xbf16, #tpu.memory_space<vmem>>, vector<16x8xbf16>,
    %c14_73 = arith.constant 14 : index
    %c16_74 = arith.constant 16 : index
    %136 = vector.load %arg18[%c14_73, %c16_74] : memref<48x24xbf16, #tpu.memory_space<vmem>>, vector<6x8xbf16>
    tpu.vector_store %arg18[%c14_73, %c16_74], %122 {strides = array<i32>} : memref<48x24xbf16, #tpu.memory_space<vmem>>, vector<6x8xbf16>,
    %c36_75 = arith.constant 36 : index
    %c16_76 = arith.constant 16 : index
    %137 = vector.load %arg18[%c36_75, %c16_76] : memref<48x24xbf16, #tpu.memory_space<vmem>>, vector<6x8xbf16>
    tpu.vector_store %arg18[%c36_75, %c16_76], %128 {strides = array<i32>} : memref<48x24xbf16, #tpu.memory_space<vmem>>, vector<6x8xbf16>,
    %c16_77 = arith.constant 16 : index
    %c0_78 = arith.constant 0 : index
    %138 = vector.load %arg18[%c16_77, %c0_78] : memref<48x24xbf16, #tpu.memory_space<vmem>>, vector<28x24xbf16>
    %c1 = arith.constant 1 : index
    %c0_79 = arith.constant 0 : index
    %c0_80 = arith.constant 0 : index
    %139 = vector.load %arg8[%c1, %c0_79, %c0_80] : memref<3x24x8xbf16, #tpu.memory_space<vmem>>, vector<1x24x8xbf16>
    %140 = vector.shape_cast %139 : vector<1x24x8xbf16> to vector<24x8xbf16>
    %cst_81 = arith.constant dense<0.000000e+00> : vector<28x8xf32>
    %141 = tpu.matmul %138, %140, %cst_81 {dimension_numbers = #tpu.dot_dimension_numbers<[1], [0], [0], [1], [0, 0, 1, 1], [], []>} : vector<28x24xbf16>, vector<24x8xbf16>, vector<28x8xf32> -> vector<28x8xf32>
    %c1_82 = arith.constant 1 : index
    %c0_83 = arith.constant 0 : index
    %142 = vector.load %arg9[%c1_82, %c0_83] : memref<3x8xf32, #tpu.memory_space<vmem>>, vector<1x8xf32>
    %143 = vector.broadcast %142 : vector<1x8xf32> to vector<28x8xf32>
    %144 = arith.addf %141, %143 : vector<28x8xf32>
    %cst_84 = arith.constant 0.000000e+00 : f32
    %145 = vector.broadcast %cst_84 : f32 to vector<28x8xf32>
    %146 = arith.maximumf %144, %145 : vector<28x8xf32>
    %c1_85 = arith.constant 1 : index
    %c0_86 = arith.constant 0 : index
    %147 = vector.load %arg10[%c1_85, %c0_86] : memref<3x8xf32, #tpu.memory_space<vmem>>, vector<1x8xf32>
    %148 = vector.broadcast %147 : vector<1x8xf32> to vector<28x8xf32>
    %149 = arith.mulf %146, %148 : vector<28x8xf32>
    %c1_87 = arith.constant 1 : index
    %c0_88 = arith.constant 0 : index
    %150 = vector.load %arg11[%c1_87, %c0_88] : memref<3x8xf32, #tpu.memory_space<vmem>>, vector<1x8xf32>
    %151 = vector.broadcast %150 : vector<1x8xf32> to vector<28x8xf32>
    %152 = arith.addf %149, %151 : vector<28x8xf32>
    %153 = vector.extract_strided_slice %152 {offsets = [6, 0], sizes = [16, 8], strides = [1, 1]} : vector<28x8xf32> to vector<16x8xf32>
    %154 = arith.truncf %153 : vector<16x8xf32> to vector<16x8xbf16>
    %c0_89 = arith.constant 0 : index
    %c8_90 = arith.constant 8 : index
    %155 = vector.load %arg19[%c0_89, %c8_90] : memref<16x32xbf16, #tpu.memory_space<vmem>>, vector<16x8xbf16>
    tpu.vector_store %arg19[%c0_89, %c8_90], %154 {strides = array<i32>} : memref<16x32xbf16, #tpu.memory_space<vmem>>, vector<16x8xbf16>,
    %156 = vector.extract_strided_slice %152 {offsets = [6, 0], sizes = [16, 8], strides = [1, 1]} : vector<28x8xf32> to vector<16x8xf32>
    %157 = vector.extract_strided_slice %21 {offsets = [0, 16], sizes = [16, 8], strides = [1, 1]} : vector<16x32xf32> to vector<16x8xf32>
    %158 = arith.addf %156, %157 : vector<16x8xf32>
    %cst_91 = arith.constant 0.000000e+00 : f32
    %159 = vector.shape_cast %5 : vector<16x1xi1> to vector<16x1xi1>
    %160 = vector.broadcast %159 : vector<16x1xi1> to vector<16x8xi1>
    %161 = vector.broadcast %cst_91 : f32 to vector<16x8xf32>
    %162 = arith.select %160, %158, %161 : vector<16x8xi1>, vector<16x8xf32>
    %163 = arith.truncf %162 : vector<16x8xf32> to vector<16x8xbf16>
    %164 = vector.extract_strided_slice %152 {offsets = [0, 0], sizes = [6, 8], strides = [1, 1]} : vector<28x8xf32> to vector<6x8xf32>
    %165 = vector.extract_strided_slice %52 {offsets = [0, 16], sizes = [6, 8], strides = [1, 1]} : vector<12x32xf32> to vector<6x8xf32>
    %166 = arith.addf %164, %165 : vector<6x8xf32>
    %167 = vector.extract_strided_slice %152 {offsets = [22, 0], sizes = [6, 8], strides = [1, 1]} : vector<28x8xf32> to vector<6x8xf32>
    %168 = vector.extract_strided_slice %52 {offsets = [6, 16], sizes = [6, 8], strides = [1, 1]} : vector<12x32xf32> to vector<6x8xf32>
    %169 = arith.addf %167, %168 : vector<6x8xf32>
    %170 = vector.extract_strided_slice %37 {offsets = [0, 0], sizes = [6, 1], strides = [1, 1]} : vector<12x1xi1> to vector<6x1xi1>
    %cst_92 = arith.constant 0.000000e+00 : f32
    %171 = vector.shape_cast %170 : vector<6x1xi1> to vector<6x1xi1>
    %172 = vector.broadcast %171 : vector<6x1xi1> to vector<6x8xi1>
    %173 = vector.broadcast %cst_92 : f32 to vector<6x8xf32>
    %174 = arith.select %172, %166, %173 : vector<6x8xi1>, vector<6x8xf32>
    %175 = arith.truncf %174 : vector<6x8xf32> to vector<6x8xbf16>
    %176 = vector.extract_strided_slice %37 {offsets = [6, 0], sizes = [6, 1], strides = [1, 1]} : vector<12x1xi1> to vector<6x1xi1>
    %cst_93 = arith.constant 0.000000e+00 : f32
    %177 = vector.shape_cast %176 : vector<6x1xi1> to vector<6x1xi1>
    %178 = vector.broadcast %177 : vector<6x1xi1> to vector<6x8xi1>
    %179 = vector.broadcast %cst_93 : f32 to vector<6x8xf32>
    %180 = arith.select %178, %169, %179 : vector<6x8xi1>, vector<6x8xf32>
    %181 = arith.truncf %180 : vector<6x8xf32> to vector<6x8xbf16>
    %c24_94 = arith.constant 24 : index
    %c0_95 = arith.constant 0 : index
    %182 = vector.load %arg18[%c24_94, %c0_95] : memref<48x24xbf16, #tpu.memory_space<vmem>>, vector<16x8xbf16>
    tpu.vector_store %arg18[%c24_94, %c0_95], %163 {strides = array<i32>} : memref<48x24xbf16, #tpu.memory_space<vmem>>, vector<16x8xbf16>,
    %c18_96 = arith.constant 18 : index
    %c0_97 = arith.constant 0 : index
    %183 = vector.load %arg18[%c18_96, %c0_97] : memref<48x24xbf16, #tpu.memory_space<vmem>>, vector<6x8xbf16>
    tpu.vector_store %arg18[%c18_96, %c0_97], %175 {strides = array<i32>} : memref<48x24xbf16, #tpu.memory_space<vmem>>, vector<6x8xbf16>,
    %c40_98 = arith.constant 40 : index
    %c0_99 = arith.constant 0 : index
    %184 = vector.load %arg18[%c40_98, %c0_99] : memref<48x24xbf16, #tpu.memory_space<vmem>>, vector<6x8xbf16>
    tpu.vector_store %arg18[%c40_98, %c0_99], %181 {strides = array<i32>} : memref<48x24xbf16, #tpu.memory_space<vmem>>, vector<6x8xbf16>,
    %c22_100 = arith.constant 22 : index
    %c8_101 = arith.constant 8 : index
    %185 = vector.load %arg18[%c22_100, %c8_101] : memref<48x24xbf16, #tpu.memory_space<vmem>>, vector<16x8xbf16>
    tpu.vector_store %arg18[%c22_100, %c8_101], %163 {strides = array<i32>} : memref<48x24xbf16, #tpu.memory_space<vmem>>, vector<16x8xbf16>,
    %c16_102 = arith.constant 16 : index
    %c8_103 = arith.constant 8 : index
    %186 = vector.load %arg18[%c16_102, %c8_103] : memref<48x24xbf16, #tpu.memory_space<vmem>>, vector<6x8xbf16>
    tpu.vector_store %arg18[%c16_102, %c8_103], %175 {strides = array<i32>} : memref<48x24xbf16, #tpu.memory_space<vmem>>, vector<6x8xbf16>,
    %c38_104 = arith.constant 38 : index
    %c8_105 = arith.constant 8 : index
    %187 = vector.load %arg18[%c38_104, %c8_105] : memref<48x24xbf16, #tpu.memory_space<vmem>>, vector<6x8xbf16>
    tpu.vector_store %arg18[%c38_104, %c8_105], %181 {strides = array<i32>} : memref<48x24xbf16, #tpu.memory_space<vmem>>, vector<6x8xbf16>,
    %c20_106 = arith.constant 20 : index
    %c16_107 = arith.constant 16 : index
    %188 = vector.load %arg18[%c20_106, %c16_107] : memref<48x24xbf16, #tpu.memory_space<vmem>>, vector<16x8xbf16>
    tpu.vector_store %arg18[%c20_106, %c16_107], %163 {strides = array<i32>} : memref<48x24xbf16, #tpu.memory_space<vmem>>, vector<16x8xbf16>,
    %c14_108 = arith.constant 14 : index
    %c16_109 = arith.constant 16 : index
    %189 = vector.load %arg18[%c14_108, %c16_109] : memref<48x24xbf16, #tpu.memory_space<vmem>>, vector<6x8xbf16>
    tpu.vector_store %arg18[%c14_108, %c16_109], %175 {strides = array<i32>} : memref<48x24xbf16, #tpu.memory_space<vmem>>, vector<6x8xbf16>,
    %c36_110 = arith.constant 36 : index
    %c16_111 = arith.constant 16 : index
    %190 = vector.load %arg18[%c36_110, %c16_111] : memref<48x24xbf16, #tpu.memory_space<vmem>>, vector<6x8xbf16>
    tpu.vector_store %arg18[%c36_110, %c16_111], %181 {strides = array<i32>} : memref<48x24xbf16, #tpu.memory_space<vmem>>, vector<6x8xbf16>,
    %c16_112 = arith.constant 16 : index
    %c0_113 = arith.constant 0 : index
    %191 = vector.load %arg18[%c16_112, %c0_113] : memref<48x24xbf16, #tpu.memory_space<vmem>>, vector<28x24xbf16>
    %c2 = arith.constant 2 : index
    %c0_114 = arith.constant 0 : index
    %c0_115 = arith.constant 0 : index
    %192 = vector.load %arg8[%c2, %c0_114, %c0_115] : memref<3x24x8xbf16, #tpu.memory_space<vmem>>, vector<1x24x8xbf16>
    %193 = vector.shape_cast %192 : vector<1x24x8xbf16> to vector<24x8xbf16>
    %cst_116 = arith.constant dense<0.000000e+00> : vector<28x8xf32>
    %194 = tpu.matmul %191, %193, %cst_116 {dimension_numbers = #tpu.dot_dimension_numbers<[1], [0], [0], [1], [0, 0, 1, 1], [], []>} : vector<28x24xbf16>, vector<24x8xbf16>, vector<28x8xf32> -> vector<28x8xf32>
    %c2_117 = arith.constant 2 : index
    %c0_118 = arith.constant 0 : index
    %195 = vector.load %arg9[%c2_117, %c0_118] : memref<3x8xf32, #tpu.memory_space<vmem>>, vector<1x8xf32>
    %196 = vector.broadcast %195 : vector<1x8xf32> to vector<28x8xf32>
    %197 = arith.addf %194, %196 : vector<28x8xf32>
    %cst_119 = arith.constant 0.000000e+00 : f32
    %198 = vector.broadcast %cst_119 : f32 to vector<28x8xf32>
    %199 = arith.maximumf %197, %198 : vector<28x8xf32>
    %c2_120 = arith.constant 2 : index
    %c0_121 = arith.constant 0 : index
    %200 = vector.load %arg10[%c2_120, %c0_121] : memref<3x8xf32, #tpu.memory_space<vmem>>, vector<1x8xf32>
    %201 = vector.broadcast %200 : vector<1x8xf32> to vector<28x8xf32>
    %202 = arith.mulf %199, %201 : vector<28x8xf32>
    %c2_122 = arith.constant 2 : index
    %c0_123 = arith.constant 0 : index
    %203 = vector.load %arg11[%c2_122, %c0_123] : memref<3x8xf32, #tpu.memory_space<vmem>>, vector<1x8xf32>
    %204 = vector.broadcast %203 : vector<1x8xf32> to vector<28x8xf32>
    %205 = arith.addf %202, %204 : vector<28x8xf32>
    %206 = vector.extract_strided_slice %205 {offsets = [6, 0], sizes = [16, 8], strides = [1, 1]} : vector<28x8xf32> to vector<16x8xf32>
    %207 = arith.truncf %206 : vector<16x8xf32> to vector<16x8xbf16>
    %c0_124 = arith.constant 0 : index
    %c16_125 = arith.constant 16 : index
    %208 = vector.load %arg19[%c0_124, %c16_125] : memref<16x32xbf16, #tpu.memory_space<vmem>>, vector<16x8xbf16>
    tpu.vector_store %arg19[%c0_124, %c16_125], %207 {strides = array<i32>} : memref<16x32xbf16, #tpu.memory_space<vmem>>, vector<16x8xbf16>,
    %209 = vector.extract_strided_slice %21 {offsets = [0, 24], sizes = [16, 8], strides = [1, 1]} : vector<16x32xf32> to vector<16x8xf32>
    %210 = arith.truncf %209 : vector<16x8xf32> to vector<16x8xbf16>
    %c0_126 = arith.constant 0 : index
    %c24_127 = arith.constant 24 : index
    %211 = vector.load %arg19[%c0_126, %c24_127] : memref<16x32xbf16, #tpu.memory_space<vmem>>, vector<16x8xbf16>
    tpu.vector_store %arg19[%c0_126, %c24_127], %210 {strides = array<i32>} : memref<16x32xbf16, #tpu.memory_space<vmem>>, vector<16x8xbf16>,
    %c0_128 = arith.constant 0 : index
    %c0_129 = arith.constant 0 : index
    %212 = vector.load %arg19[%c0_128, %c0_129] : memref<16x32xbf16, #tpu.memory_space<vmem>>, vector<16x32xbf16>
    %c0_130 = arith.constant 0 : index
    %c0_131 = arith.constant 0 : index
    %213 = vector.load %arg12[%c0_130, %c0_131] : memref<32x32xbf16, #tpu.memory_space<vmem>>, vector<32x32xbf16>
    %cst_132 = arith.constant dense<0.000000e+00> : vector<16x32xf32>
    %214 = tpu.matmul %212, %213, %cst_132 {dimension_numbers = #tpu.dot_dimension_numbers<[1], [0], [0], [1], [0, 0, 1, 1], [], []>} : vector<16x32xbf16>, vector<32x32xbf16>, vector<16x32xf32> -> vector<16x32xf32>
    %c0_133 = arith.constant 0 : index
    %c0_134 = arith.constant 0 : index
    %215 = vector.load %arg13[%c0_133, %c0_134] : memref<1x32xf32, #tpu.memory_space<vmem>>, vector<1x32xf32>
    %216 = vector.broadcast %215 : vector<1x32xf32> to vector<16x32xf32>
    %217 = arith.addf %214, %216 : vector<16x32xf32>
    %cst_135 = arith.constant 0.000000e+00 : f32
    %218 = vector.broadcast %cst_135 : f32 to vector<16x32xf32>
    %219 = arith.maximumf %217, %218 : vector<16x32xf32>
    %c0_136 = arith.constant 0 : index
    %c0_137 = arith.constant 0 : index
    %220 = vector.load %arg14[%c0_136, %c0_137] : memref<1x32xf32, #tpu.memory_space<vmem>>, vector<1x32xf32>
    %221 = vector.broadcast %220 : vector<1x32xf32> to vector<16x32xf32>
    %222 = arith.mulf %219, %221 : vector<16x32xf32>
    %c0_138 = arith.constant 0 : index
    %c0_139 = arith.constant 0 : index
    %223 = vector.load %arg15[%c0_138, %c0_139] : memref<1x32xf32, #tpu.memory_space<vmem>>, vector<1x32xf32>
    %224 = vector.broadcast %223 : vector<1x32xf32> to vector<16x32xf32>
    %225 = arith.addf %222, %224 : vector<16x32xf32>
    %226 = arith.truncf %225 : vector<16x32xf32> to vector<16x32xbf16>
    %c0_140 = arith.constant 0 : index
    %c0_141 = arith.constant 0 : index
    %c0_142 = arith.constant 0 : index
    %227 = vector.load %arg16[%c0_140, %c0_141, %c0_142] : memref<1x16x32xbf16, #tpu.memory_space<vmem>>, vector<1x16x32xbf16>
    %228 = vector.shape_cast %227 : vector<1x16x32xbf16> to vector<16x32xbf16>
    %229 = vector.shape_cast %226 : vector<16x32xbf16> to vector<1x16x32xbf16>
    tpu.vector_store %arg16[%c0_140, %c0_141, %c0_142], %229 {strides = array<i32>} : memref<1x16x32xbf16, #tpu.memory_space<vmem>>, vector<1x16x32xbf16>,
    %cst_143 = arith.constant 0.000000e+00 : f32
    %230 = vector.shape_cast %5 : vector<16x1xi1> to vector<16x1xi1>
    %231 = vector.broadcast %230 : vector<16x1xi1> to vector<16x32xi1>
    %232 = vector.broadcast %cst_143 : f32 to vector<16x32xf32>
    %233 = arith.select %231, %225, %232 : vector<16x32xi1>, vector<16x32xf32>
    %cst_144 = arith.constant dense<0.000000e+00> : vector<32xf32>
    %234 = vector.multi_reduction <add>, %233, %cst_144 [0] : vector<16x32xf32> to vector<32xf32>
    %235 = vector.shape_cast %234 : vector<32xf32> to vector<1x32xf32>
    %c0_145 = arith.constant 0 : index
    %c0_146 = arith.constant 0 : index
    %c0_147 = arith.constant 0 : index
    %236 = vector.load %arg17[%c0_145, %c0_146, %c0_147] : memref<1x1x32xf32, #tpu.memory_space<vmem>>, vector<1x1x32xf32>
    %237 = vector.shape_cast %236 : vector<1x1x32xf32> to vector<1x32xf32>
    %238 = vector.shape_cast %235 : vector<1x32xf32> to vector<1x1x32xf32>
    tpu.vector_store %arg17[%c0_145, %c0_146, %c0_147], %238 {strides = array<i32>} : memref<1x1x32xf32, #tpu.memory_space<vmem>>, vector<1x1x32xf32>,
    return
  }
  func.func @transform_0(%arg0: i32, %arg1: i32) -> (i32, i32, i32) {
    %c0_i32 = arith.constant 0 : i32
    %c0_i32_0 = arith.constant 0 : i32
    return %arg0, %arg1, %c0_i32 : i32, i32, i32
  }
  func.func @transform_1(%arg0: i32, %arg1: i32) -> (i32, i32, i32) {
    %c2_i32 = arith.constant 2 : i32
    %0 = arith.muli %arg0, %c2_i32 : i32
    %1 = arith.addi %0, %arg1 : i32
    %c0_i32 = arith.constant 0 : i32
    %c0_i32_0 = arith.constant 0 : i32
    %c0_i32_1 = arith.constant 0 : i32
    return %1, %c0_i32, %c0_i32_0 : i32, i32, i32
  }
  func.func @transform_2(%arg0: i32, %arg1: i32) -> (i32, i32) {
    %c0_i32 = arith.constant 0 : i32
    %c0_i32_0 = arith.constant 0 : i32
    %c0_i32_1 = arith.constant 0 : i32
    return %c0_i32, %c0_i32_0 : i32, i32
  }
  func.func @transform_3(%arg0: i32, %arg1: i32) -> (i32, i32) {
    %c0_i32 = arith.constant 0 : i32
    %c0_i32_0 = arith.constant 0 : i32
    %c0_i32_1 = arith.constant 0 : i32
    return %c0_i32, %c0_i32_0 : i32, i32
  }
  func.func @transform_4(%arg0: i32, %arg1: i32) -> (i32, i32) {
    %c0_i32 = arith.constant 0 : i32
    %c0_i32_0 = arith.constant 0 : i32
    %c0_i32_1 = arith.constant 0 : i32
    return %c0_i32, %c0_i32_0 : i32, i32
  }
  func.func @transform_5(%arg0: i32, %arg1: i32) -> (i32, i32) {
    %c0_i32 = arith.constant 0 : i32
    %c0_i32_0 = arith.constant 0 : i32
    %c0_i32_1 = arith.constant 0 : i32
    return %c0_i32, %c0_i32_0 : i32, i32
  }
  func.func @transform_6(%arg0: i32, %arg1: i32) -> (i32, i32, i32) {
    %c0_i32 = arith.constant 0 : i32
    %c0_i32_0 = arith.constant 0 : i32
    %c0_i32_1 = arith.constant 0 : i32
    %c0_i32_2 = arith.constant 0 : i32
    return %c0_i32, %c0_i32_0, %c0_i32_1 : i32, i32, i32
  }
  func.func @transform_7(%arg0: i32, %arg1: i32) -> (i32, i32) {
    %c0_i32 = arith.constant 0 : i32
    %c0_i32_0 = arith.constant 0 : i32
    %c0_i32_1 = arith.constant 0 : i32
    return %c0_i32, %c0_i32_0 : i32, i32
  }
  func.func @transform_8(%arg0: i32, %arg1: i32) -> (i32, i32) {
    %c0_i32 = arith.constant 0 : i32
    %c0_i32_0 = arith.constant 0 : i32
    %c0_i32_1 = arith.constant 0 : i32
    return %c0_i32, %c0_i32_0 : i32, i32
  }
  func.func @transform_9(%arg0: i32, %arg1: i32) -> (i32, i32) {
    %c0_i32 = arith.constant 0 : i32
    %c0_i32_0 = arith.constant 0 : i32
    %c0_i32_1 = arith.constant 0 : i32
    return %c0_i32, %c0_i32_0 : i32, i32
  }
  func.func @transform_10(%arg0: i32, %arg1: i32) -> (i32, i32) {
    %c0_i32 = arith.constant 0 : i32
    %c0_i32_0 = arith.constant 0 : i32
    %c0_i32_1 = arith.constant 0 : i32
    return %c0_i32, %c0_i32_0 : i32, i32
  }
  func.func @transform_11(%arg0: i32, %arg1: i32) -> (i32, i32) {
    %c0_i32 = arith.constant 0 : i32
    %c0_i32_0 = arith.constant 0 : i32
    %c0_i32_1 = arith.constant 0 : i32
    return %c0_i32, %c0_i32_0 : i32, i32
  }
  func.func @transform_12(%arg0: i32, %arg1: i32) -> (i32, i32) {
    %c0_i32 = arith.constant 0 : i32
    %c0_i32_0 = arith.constant 0 : i32
    %c0_i32_1 = arith.constant 0 : i32
    return %c0_i32, %c0_i32_0 : i32, i32
  }
  func.func @transform_13(%arg0: i32, %arg1: i32) -> (i32, i32) {
    %c0_i32 = arith.constant 0 : i32
    %c0_i32_0 = arith.constant 0 : i32
    %c0_i32_1 = arith.constant 0 : i32
    return %c0_i32, %c0_i32_0 : i32, i32
  }
  func.func @transform_14(%arg0: i32, %arg1: i32) -> (i32, i32, i32) {
    %c0_i32 = arith.constant 0 : i32
    %c0_i32_0 = arith.constant 0 : i32
    return %arg0, %arg1, %c0_i32 : i32, i32, i32
  }
  func.func @transform_15(%arg0: i32, %arg1: i32) -> (i32, i32, i32) {
    %c2_i32 = arith.constant 2 : i32
    %0 = arith.muli %arg0, %c2_i32 : i32
    %1 = arith.addi %0, %arg1 : i32
    %c0_i32 = arith.constant 0 : i32
    %c0_i32_0 = arith.constant 0 : i32
    %c0_i32_1 = arith.constant 0 : i32
    return %1, %c0_i32, %c0_i32_0 : i32, i32, i32
  }
}

</mosaic_0001>

<llo_original>
// kernel: tpu_custom_call.1
$region0: #{tpu_custom_call.1}
  #allocation0 [shape = 'u32[]', space=smem, size = 0x4, offset = 0x4, fixed_abs, tag = 'smem constant byte address 0x4 - core index']
  #allocation1 [shape = 'u32[144,128]{1,0:T(1,128)}', space=vmem, size = 0x12000, scoped, tag = 'internal scratch']
  #allocation2 [shape = 'bf16[48,24]{1,0:T(8,128)(2,1)}', space=vmem, size = 0x3000, scoped, tag = 'scratch operand']
  #allocation3 [shape = 'bf16[16,32]{1,0:T(8,128)(2,1)}', space=vmem, size = 0x1000, scoped, tag = 'scratch operand']
  %s0 = inlined_call_operand.vmem [shape: f32[2,32,16], index: 0, kind: input, shape index: {}]
  %s1 = inlined_call_operand.vmem [shape: f32[4,12,16], index: 1, kind: input, shape index: {}]
  %s2 = inlined_call_operand.vmem [shape: bf16[16,32], index: 2, kind: input, shape index: {}]
  %s3 = inlined_call_operand.vmem [shape: f32[1,32], index: 3, kind: input, shape index: {}]
  %s4 = inlined_call_operand.vmem [shape: f32[1,32], index: 4, kind: input, shape index: {}]
  %s5 = inlined_call_operand.vmem [shape: f32[1,32], index: 5, kind: input, shape index: {}]
  %s6 = inlined_call_operand.vmem [shape: bf16[3,24,8], index: 6, kind: input, shape index: {}]
  %s7 = inlined_call_operand.vmem [shape: f32[3,8], index: 7, kind: input, shape index: {}]
  %s8 = inlined_call_operand.vmem [shape: f32[3,8], index: 8, kind: input, shape index: {}]
  %s9 = inlined_call_operand.vmem [shape: f32[3,8], index: 9, kind: input, shape index: {}]
  %s10 = inlined_call_operand.vmem [shape: bf16[32,32], index: 10, kind: input, shape index: {}]
  %s11 = inlined_call_operand.vmem [shape: f32[1,32], index: 11, kind: input, shape index: {}]
  %s12 = inlined_call_operand.vmem [shape: f32[1,32], index: 12, kind: input, shape index: {}]
  %s13 = inlined_call_operand.vmem [shape: f32[1,32], index: 13, kind: input, shape index: {}]
  %s14 = inlined_call_operand.hbm [shape: bf16[2,32,32], index: 14, kind: output, shape index: {0}]
  %s15 = inlined_call_operand.hbm [shape: f32[4,1,32], index: 15, kind: output, shape index: {1}]
  %16 = xla_tuple %s14, %s15
  %s17 = sld [smem:[#allocation0]]
  $region97: #{tpu_custom_call.1} parent=0
    _
  %s19 = ssub.s32 1, %s17
  %s20 = scalar_select 0, %s19, %s17
  $region1: #{tpu_custom_call.1} parent=0
    #allocation4 [shape = 'u8[8192]{0}', space=vmem, size = 0x2000, scoped, tag = 'output window, operand 0']
    #allocation5 [shape = 's32[2]{0}', space=sflag, size = 0x8, scoped, tag = 'scoped memory for tpu_custom_call.1']
    #allocation6 [shape = 'u8[1024]{0}', space=vmem, size = 0x400, scoped, tag = 'output window, operand 1']
    #allocation7 [shape = 's32[2]{0}', space=sflag, size = 0x8, scoped, tag = 'scoped memory for tpu_custom_call.1']
    %21 = vsyncpa [#allocation5], 0
    %s22 = scalar_lea.sflag [#allocation5], 1
    %23 = vsyncpa %s22, 0
    %24 = vsyncpa [#allocation7], 0
    %s25 = scalar_lea.sflag [#allocation7], 1
    %26 = vsyncpa %s25, 0
    loop: start=0, step=1, limit=6
    $region2: #{tpu_custom_call.1} parent=1 // loop_pre_header
      _
    $region3: #{tpu_custom_call.1} parent=1 // loop_header
      %s28 = sphi 0, %s32
      %p29 = scmp.ge.s32.totalorder %s28, 6
      %s35 = sphi 0, %s47
      %s36 = sphi 0, %s43
      %s37 = sphi 0, %s35
      %s38 = sphi 0, %s36
      %s39 = sphi 0, %s37
      %s40 = sphi 0, %s38
      %s52 = sphi 0, %s54
      %s55 = sphi 0, %s52
      %s56 = sphi 0, %s55
      %s72 = sphi 0, %s56
      %s82 = sphi 0, %s84
      %s85 = sphi 0, %s82
      %s86 = sphi 0, %s85
      %s102 = sphi 0, %s86
      %s106 = sphi 0, %s106
      %s108 = sphi 0, %s106
      %s109 = sphi 0, %s108
      %s123 = sphi 0, %s109
      %s127 = sphi 0, %s127
      %s129 = sphi 0, %s127
      %s130 = sphi 0, %s129
      %s144 = sphi 0, %s130
      %s148 = sphi 0, %s148
      %s150 = sphi 0, %s148
      %s151 = sphi 0, %s150
      %s165 = sphi 0, %s151
      %s169 = sphi 0, %s169
      %s171 = sphi 0, %s169
      %s172 = sphi 0, %s171
      %s186 = sphi 0, %s172
      %s190 = sphi 0, %s190
      %s192 = sphi 0, %s190
      %s193 = sphi 0, %s192
      %s207 = sphi 0, %s193
      %s211 = sphi 0, %s211
      %s213 = sphi 0, %s211
      %s214 = sphi 0, %s213
      %s228 = sphi 0, %s214
      %s232 = sphi 0, %s232
      %s234 = sphi 0, %s232
      %s235 = sphi 0, %s234
      %s249 = sphi 0, %s235
      %s253 = sphi 0, %s253
      %s255 = sphi 0, %s253
      %s256 = sphi 0, %s255
      %s270 = sphi 0, %s256
      %s274 = sphi 0, %s274
      %s276 = sphi 0, %s274
      %s277 = sphi 0, %s276
      %s291 = sphi 0, %s277
      %s295 = sphi 0, %s295
      %s297 = sphi 0, %s295
      %s298 = sphi 0, %s297
      %s312 = sphi 0, %s298
      %s316 = sphi 0, %s316
      %s318 = sphi 0, %s316
      %s319 = sphi 0, %s318
      %s333 = sphi 0, %s319
      %s337 = sphi 0, %s337
      %s339 = sphi 0, %s337
      %s340 = sphi 0, %s339
      %s354 = sphi 0, %s340
      %s362 = sphi 0, %s364
      %s365 = sphi 0, %s362
      %s366 = sphi 0, %s365
      %s382 = sphi 0, %s366
      %s392 = sphi 0, %s394
      %s395 = sphi 0, %s392
      %s396 = sphi 0, %s395
      %s412 = sphi 0, %s396
    $region4: #{tpu_custom_call.1} parent=1 // loop_header_branch
      %31 = sbr.rel (%p29) target = $region8
    $region5: #{tpu_custom_call.1} parent=1 // loop_body
      %s33 = ssub.s32 %s28, 1
      %s34 = ssub.s32 %s28, 2
      %s41 = sadd.s32 1, %s36
      %p42 = scmp.ge.s32.totalorder %s41, 2
      %s43 = scalar_select %p42, 0, %s41
      %s44 = sadd.s32 1, %s35
      %s45 = scalar_select %p42, %s44, %s35
      %p46 = scmp.ge.s32.totalorder %s45, 2
      %s47 = scalar_select %p46, 0, %s45
      %s48 = ssub.s32 %s35, %s47
      %s49 = ssub.s32 %s36, %s43
      %s50 = sor.u32 %s48, %s49
      %p51 = scmp.eq.s32.totalorder %s50, 0
      %s53 = sadd.s32 %s52, 1
      %s54 = scalar_select %p51, %s52, %s53
      %p57 = pneg %p51
      %p58 = scmp.eq.s32.totalorder %s28, 3
      %p59 = por %p57, %p58
      %p60 = scmp.ne.s32.totalorder %s52, %s55
      %p61 = scmp.eq.s32.totalorder %s28, 0
      %p62 = por %p60, %p61
      %p63 = scmp.ne.s32.totalorder %s52, %s55
      %p64 = scmp.eq.s32.totalorder %s33, 3
      %p65 = por %p63, %p64
      %p66 = scmp.ne.s32.totalorder %s55, %s56
      %p67 = scmp.eq.s32.totalorder %s33, 0
      %p68 = por %p66, %p67
      %p69 = scmp.ne.s32.totalorder %s55, %s56
      %p70 = scmp.eq.s32.totalorder %s34, 3
      %p71 = por %p69, %p70
      %p73 = scmp.ne.s32.totalorder %s56, %s72
      %p74 = scmp.eq.s32.totalorder %s34, 0
      %p75 = por %p73, %p74
      %s76 = smul.u32 %s35, 2
      %s77 = sadd.s32 %s76, %s36
      %s78 = smul.u32 %s47, 2
      %s79 = sadd.s32 %s78, %s43
      %s80 = ssub.s32 %s77, %s79
      %p81 = scmp.eq.s32.totalorder %s80, 0
      %s83 = sadd.s32 %s82, 1
      %s84 = scalar_select %p81, %s82, %s83
      %p87 = pneg %p81
      %p88 = scmp.eq.s32.totalorder %s28, 3
      %p89 = por %p87, %p88
      %p90 = scmp.ne.s32.totalorder %s82, %s85
      %p91 = scmp.eq.s32.totalorder %s28, 0
      %p92 = por %p90, %p91
      %p93 = scmp.ne.s32.totalorder %s82, %s85
      %p94 = scmp.eq.s32.totalorder %s33, 3
      %p95 = por %p93, %p94
      %p96 = scmp.ne.s32.totalorder %s85, %s86
      %p97 = scmp.eq.s32.totalorder %s33, 0
      %p98 = por %p96, %p97
      %p99 = scmp.ne.s32.totalorder %s85, %s86
      %p100 = scmp.eq.s32.totalorder %s34, 3
      %p101 = por %p99, %p100
      %p103 = scmp.ne.s32.totalorder %s86, %s102
      %p104 = scmp.eq.s32.totalorder %s34, 0
      %p105 = por %p103, %p104
      %s107 = sadd.s32 %s106, 1
      %p110 = scmp.eq.s32.totalorder %s28, 3
      %p111 = scmp.ne.s32.totalorder %s106, %s108
      %p112 = scmp.eq.s32.totalorder %s28, 0
      %p113 = por %p111, %p112
      %p114 = scmp.ne.s32.totalorder %s106, %s108
      %p115 = scmp.eq.s32.totalorder %s33, 3
      %p116 = por %p114, %p115
      %p117 = scmp.ne.s32.totalorder %s108, %s109
      %p118 = scmp.eq.s32.totalorder %s33, 0
      %p119 = por %p117, %p118
      %p120 = scmp.ne.s32.totalorder %s108, %s109
      %p121 = scmp.eq.s32.totalorder %s34, 3
      %p122 = por %p120, %p121
      %p124 = scmp.ne.s32.totalorder %s109, %s123
      %p125 = scmp.eq.s32.totalorder %s34, 0
      %p126 = por %p124, %p125
      %s128 = sadd.s32 %s127, 1
      %p131 = scmp.eq.s32.totalorder %s28, 3
      %p132 = scmp.ne.s32.totalorder %s127, %s129
      %p133 = scmp.eq.s32.totalorder %s28, 0
      %p134 = por %p132, %p133
      %p135 = scmp.ne.s32.totalorder %s127, %s129
      %p136 = scmp.eq.s32.totalorder %s33, 3
      %p137 = por %p135, %p136
      %p138 = scmp.ne.s32.totalorder %s129, %s130
      %p139 = scmp.eq.s32.totalorder %s33, 0
      %p140 = por %p138, %p139
      %p141 = scmp.ne.s32.totalorder %s129, %s130
      %p142 = scmp.eq.s32.totalorder %s34, 3
      %p143 = por %p141, %p142
      %p145 = scmp.ne.s32.totalorder %s130, %s144
      %p146 = scmp.eq.s32.totalorder %s34, 0
      %p147 = por %p145, %p146
      %s149 = sadd.s32 %s148, 1
      %p152 = scmp.eq.s32.totalorder %s28, 3
      %p153 = scmp.ne.s32.totalorder %s148, %s150
      %p154 = scmp.eq.s32.totalorder %s28, 0
      %p155 = por %p153, %p154
      %p156 = scmp.ne.s32.totalorder %s148, %s150
      %p157 = scmp.eq.s32.totalorder %s33, 3
      %p158 = por %p156, %p157
      %p159 = scmp.ne.s32.totalorder %s150, %s151
      %p160 = scmp.eq.s32.totalorder %s33, 0
      %p161 = por %p159, %p160
      %p162 = scmp.ne.s32.totalorder %s150, %s151
      %p163 = scmp.eq.s32.totalorder %s34, 3
      %p164 = por %p162, %p163
      %p166 = scmp.ne.s32.totalorder %s151, %s165
      %p167 = scmp.eq.s32.totalorder %s34, 0
      %p168 = por %p166, %p167
      %s170 = sadd.s32 %s169, 1
      %p173 = scmp.eq.s32.totalorder %s28, 3
      %p174 = scmp.ne.s32.totalorder %s169, %s171
      %p175 = scmp.eq.s32.totalorder %s28, 0
      %p176 = por %p174, %p175
      %p177 = scmp.ne.s32.totalorder %s169, %s171
      %p178 = scmp.eq.s32.totalorder %s33, 3
      %p179 = por %p177, %p178
      %p180 = scmp.ne.s32.totalorder %s171, %s172
      %p181 = scmp.eq.s32.totalorder %s33, 0
      %p182 = por %p180, %p181
      %p183 = scmp.ne.s32.totalorder %s171, %s172
      %p184 = scmp.eq.s32.totalorder %s34, 3
      %p185 = por %p183, %p184
      %p187 = scmp.ne.s32.totalorder %s172, %s186
      %p188 = scmp.eq.s32.totalorder %s34, 0
      %p189 = por %p187, %p188
      %s191 = sadd.s32 %s190, 1
      %p194 = scmp.eq.s32.totalorder %s28, 3
      %p195 = scmp.ne.s32.totalorder %s190, %s192
      %p196 = scmp.eq.s32.totalorder %s28, 0
      %p197 = por %p195, %p196
      %p198 = scmp.ne.s32.totalorder %s190, %s192
      %p199 = scmp.eq.s32.totalorder %s33, 3
      %p200 = por %p198, %p199
      %p201 = scmp.ne.s32.totalorder %s192, %s193
      %p202 = scmp.eq.s32.totalorder %s33, 0
      %p203 = por %p201, %p202
      %p204 = scmp.ne.s32.totalorder %s192, %s193
      %p205 = scmp.eq.s32.totalorder %s34, 3
      %p206 = por %p204, %p205
      %p208 = scmp.ne.s32.totalorder %s193, %s207
      %p209 = scmp.eq.s32.totalorder %s34, 0
      %p210 = por %p208, %p209
      %s212 = sadd.s32 %s211, 1
      %p215 = scmp.eq.s32.totalorder %s28, 3
      %p216 = scmp.ne.s32.totalorder %s211, %s213
      %p217 = scmp.eq.s32.totalorder %s28, 0
      %p218 = por %p216, %p217
      %p219 = scmp.ne.s32.totalorder %s211, %s213
      %p220 = scmp.eq.s32.totalorder %s33, 3
      %p221 = por %p219, %p220
      %p222 = scmp.ne.s32.totalorder %s213, %s214
      %p223 = scmp.eq.s32.totalorder %s33, 0
      %p224 = por %p222, %p223
      %p225 = scmp.ne.s32.totalorder %s213, %s214
      %p226 = scmp.eq.s32.totalorder %s34, 3
      %p227 = por %p225, %p226
      %p229 = scmp.ne.s32.totalorder %s214, %s228
      %p230 = scmp.eq.s32.totalorder %s34, 0
      %p231 = por %p229, %p230
      %s233 = sadd.s32 %s232, 1
      %p236 = scmp.eq.s32.totalorder %s28, 3
      %p237 = scmp.ne.s32.totalorder %s232, %s234
      %p238 = scmp.eq.s32.totalorder %s28, 0
      %p239 = por %p237, %p238
      %p240 = scmp.ne.s32.totalorder %s232, %s234
      %p241 = scmp.eq.s32.totalorder %s33, 3
      %p242 = por %p240, %p241
      %p243 = scmp.ne.s32.totalorder %s234, %s235
      %p244 = scmp.eq.s32.totalorder %s33, 0
      %p245 = por %p243, %p244
      %p246 = scmp.ne.s32.totalorder %s234, %s235
      %p247 = scmp.eq.s32.totalorder %s34, 3
      %p248 = por %p246, %p247
      %p250 = scmp.ne.s32.totalorder %s235, %s249
      %p251 = scmp.eq.s32.totalorder %s34, 0
      %p252 = por %p250, %p251
      %s254 = sadd.s32 %s253, 1
      %p257 = scmp.eq.s32.totalorder %s28, 3
      %p258 = scmp.ne.s32.totalorder %s253, %s255
      %p259 = scmp.eq.s32.totalorder %s28, 0
      %p260 = por %p258, %p259
      %p261 = scmp.ne.s32.totalorder %s253, %s255
      %p262 = scmp.eq.s32.totalorder %s33, 3
      %p263 = por %p261, %p262
      %p264 = scmp.ne.s32.totalorder %s255, %s256
      %p265 = scmp.eq.s32.totalorder %s33, 0
      %p266 = por %p264, %p265
      %p267 = scmp.ne.s32.totalorder %s255, %s256
      %p268 = scmp.eq.s32.totalorder %s34, 3
      %p269 = por %p267, %p268
      %p271 = scmp.ne.s32.totalorder %s256, %s270
      %p272 = scmp.eq.s32.totalorder %s34, 0
      %p273 = por %p271, %p272
      %s275 = sadd.s32 %s274, 1
      %p278 = scmp.eq.s32.totalorder %s28, 3
      %p279 = scmp.ne.s32.totalorder %s274, %s276
      %p280 = scmp.eq.s32.totalorder %s28, 0
      %p281 = por %p279, %p280
      %p282 = scmp.ne.s32.totalorder %s274, %s276
      %p283 = scmp.eq.s32.totalorder %s33, 3
      %p284 = por %p282, %p283
      %p285 = scmp.ne.s32.totalorder %s276, %s277
      %p286 = scmp.eq.s32.totalorder %s33, 0
      %p287 = por %p285, %p286
      %p288 = scmp.ne.s32.totalorder %s276, %s277
      %p289 = scmp.eq.s32.totalorder %s34, 3
      %p290 = por %p288, %p289
      %p292 = scmp.ne.s32.totalorder %s277, %s291
      %p293 = scmp.eq.s32.totalorder %s34, 0
      %p294 = por %p292, %p293
      %s296 = sadd.s32 %s295, 1
      %p299 = scmp.eq.s32.totalorder %s28, 3
      %p300 = scmp.ne.s32.totalorder %s295, %s297
      %p301 = scmp.eq.s32.totalorder %s28, 0
      %p302 = por %p300, %p301
      %p303 = scmp.ne.s32.totalorder %s295, %s297
      %p304 = scmp.eq.s32.totalorder %s33, 3
      %p305 = por %p303, %p304
      %p306 = scmp.ne.s32.totalorder %s297, %s298
      %p307 = scmp.eq.s32.totalorder %s33, 0
      %p308 = por %p306, %p307
      %p309 = scmp.ne.s32.totalorder %s297, %s298
      %p310 = scmp.eq.s32.totalorder %s34, 3
      %p311 = por %p309, %p310
      %p313 = scmp.ne.s32.totalorder %s298, %s312
      %p314 = scmp.eq.s32.totalorder %s34, 0
      %p315 = por %p313, %p314
      %s317 = sadd.s32 %s316, 1
      %p320 = scmp.eq.s32.totalorder %s28, 3
      %p321 = scmp.ne.s32.totalorder %s316, %s318
      %p322 = scmp.eq.s32.totalorder %s28, 0
      %p323 = por %p321, %p322
      %p324 = scmp.ne.s32.totalorder %s316, %s318
      %p325 = scmp.eq.s32.totalorder %s33, 3
      %p326 = por %p324, %p325
      %p327 = scmp.ne.s32.totalorder %s318, %s319
      %p328 = scmp.eq.s32.totalorder %s33, 0
      %p329 = por %p327, %p328
      %p330 = scmp.ne.s32.totalorder %s318, %s319
      %p331 = scmp.eq.s32.totalorder %s34, 3
      %p332 = por %p330, %p331
      %p334 = scmp.ne.s32.totalorder %s319, %s333
      %p335 = scmp.eq.s32.totalorder %s34, 0
      %p336 = por %p334, %p335
      %s338 = sadd.s32 %s337, 1
      %p341 = scmp.eq.s32.totalorder %s28, 3
      %p342 = scmp.ne.s32.totalorder %s337, %s339
      %p343 = scmp.eq.s32.totalorder %s28, 0
      %p344 = por %p342, %p343
      %p345 = scmp.ne.s32.totalorder %s337, %s339
      %p346 = scmp.eq.s32.totalorder %s33, 3
      %p347 = por %p345, %p346
      %p348 = scmp.ne.s32.totalorder %s339, %s340
      %p349 = scmp.eq.s32.totalorder %s33, 0
      %p350 = por %p348, %p349
      %p351 = scmp.ne.s32.totalorder %s339, %s340
      %p352 = scmp.eq.s32.totalorder %s34, 3
      %p353 = por %p351, %p352
      %p355 = scmp.ne.s32.totalorder %s340, %s354
      %p356 = scmp.eq.s32.totalorder %s34, 0
      %p357 = por %p355, %p356
      %s358 = ssub.s32 %s35, %s47
      %s359 = ssub.s32 %s36, %s43
      %s360 = sor.u32 %s358, %s359
      %p361 = scmp.eq.s32.totalorder %s360, 0
      %s363 = sadd.s32 %s362, 1
      %s364 = scalar_select %p361, %s362, %s363
      %p367 = pneg %p361
      %p368 = scmp.eq.s32.totalorder %s28, 3
      %p369 = por %p367, %p368
      %p370 = scmp.ne.s32.totalorder %s362, %s365
      %p371 = scmp.eq.s32.totalorder %s28, 0
      %p372 = por %p370, %p371
      %p373 = scmp.ne.s32.totalorder %s362, %s365
      %p374 = scmp.eq.s32.totalorder %s33, 3
      %p375 = por %p373, %p374
      %p376 = scmp.ne.s32.totalorder %s365, %s366
      %p377 = scmp.eq.s32.totalorder %s33, 0
      %p378 = por %p376, %p377
      %p379 = scmp.ne.s32.totalorder %s365, %s366
      %p380 = scmp.eq.s32.totalorder %s34, 3
      %p381 = por %p379, %p380
      %p383 = scmp.ne.s32.totalorder %s366, %s382
      %p384 = scmp.eq.s32.totalorder %s34, 0
      %p385 = por %p383, %p384
      %s386 = smul.u32 %s35, 2
      %s387 = sadd.s32 %s386, %s36
      %s388 = smul.u32 %s47, 2
      %s389 = sadd.s32 %s388, %s43
      %s390 = ssub.s32 %s387, %s389
      %p391 = scmp.eq.s32.totalorder %s390, 0
      %s393 = sadd.s32 %s392, 1
      %s394 = scalar_select %p391, %s392, %s393
      %p397 = pneg %p391
      %p398 = scmp.eq.s32.totalorder %s28, 3
      %p399 = por %p397, %p398
      %p400 = scmp.ne.s32.totalorder %s392, %s395
      %p401 = scmp.eq.s32.totalorder %s28, 0
      %p402 = por %p400, %p401
      %p403 = scmp.ne.s32.totalorder %s392, %s395
      %p404 = scmp.eq.s32.totalorder %s33, 3
      %p405 = por %p403, %p404
      %p406 = scmp.ne.s32.totalorder %s395, %s396
      %p407 = scmp.eq.s32.totalorder %s33, 0
      %p408 = por %p406, %p407
      %p409 = scmp.ne.s32.totalorder %s395, %s396
      %p410 = scmp.eq.s32.totalorder %s34, 3
      %p411 = por %p409, %p410
      %p413 = scmp.ne.s32.totalorder %s396, %s412
      %p414 = scmp.eq.s32.totalorder %s34, 0
      %p415 = por %p413, %p414
      %p416 = scmp.le.s32.totalorder 1, %s28
      %p417 = scmp.lt.s32.totalorder %s28, 5
      %p418 = pnand %p416, %p417
      %p419 = pneg %p418
      // Predicated region
      $region9: #{tpu_custom_call.1} parent=5 // pred_check
        _
      $region10: #{tpu_custom_call.1} parent=5 // pred_check_branch
        %421 = sbr.rel (%p418) target = $region12
      $region11: #{tpu_custom_call.1} parent=5 // pred_region
        %s422 = ssub.s32 %s28, 1
        // Predicated region
        $region13: #{tpu_custom_call.1} parent=11 // pred_check
          %p423 = pneg %p119
        $region14: #{tpu_custom_call.1} parent=11 // pred_check_branch
          %425 = sbr.rel (%p423) target = $region16
        $region15: #{tpu_custom_call.1} parent=11 // pred_region
          _
        $region16: #{tpu_custom_call.1} parent=11 // pred_fallthru
          _
        // Predicated region
        $region17: #{tpu_custom_call.1} parent=11 // pred_check
          %p426 = pneg %p140
        $region18: #{tpu_custom_call.1} parent=11 // pred_check_branch
          %428 = sbr.rel (%p426) target = $region20
        $region19: #{tpu_custom_call.1} parent=11 // pred_region
          _
        $region20: #{tpu_custom_call.1} parent=11 // pred_fallthru
          _
        // Predicated region
        $region21: #{tpu_custom_call.1} parent=11 // pred_check
          %p429 = pneg %p161
        $region22: #{tpu_custom_call.1} parent=11 // pred_check_branch
          %431 = sbr.rel (%p429) target = $region24
        $region23: #{tpu_custom_call.1} parent=11 // pred_region
          _
        $region24: #{tpu_custom_call.1} parent=11 // pred_fallthru
          _
        // Predicated region
        $region25: #{tpu_custom_call.1} parent=11 // pred_check
          %p432 = pneg %p182
        $region26: #{tpu_custom_call.1} parent=11 // pred_check_branch
          %434 = sbr.rel (%p432) target = $region28
        $region27: #{tpu_custom_call.1} parent=11 // pred_region
          _
        $region28: #{tpu_custom_call.1} parent=11 // pred_fallthru
          _
        // Predicated region
        $region29: #{tpu_custom_call.1} parent=11 // pred_check
          %p435 = pneg %p203
        $region30: #{tpu_custom_call.1} parent=11 // pred_check_branch
          %437 = sbr.rel (%p435) target = $region32
        $region31: #{tpu_custom_call.1} parent=11 // pred_region
          _
        $region32: #{tpu_custom_call.1} parent=11 // pred_fallthru
          _
        // Predicated region
        $region33: #{tpu_custom_call.1} parent=11 // pred_check
          %p438 = pneg %p224
        $region34: #{tpu_custom_call.1} parent=11 // pred_check_branch
          %440 = sbr.rel (%p438) target = $region36
        $region35: #{tpu_custom_call.1} parent=11 // pred_region
          _
        $region36: #{tpu_custom_call.1} parent=11 // pred_fallthru
          _
        // Predicated region
        $region37: #{tpu_custom_call.1} parent=11 // pred_check
          %p441 = pneg %p245
        $region38: #{tpu_custom_call.1} parent=11 // pred_check_branch
          %443 = sbr.rel (%p441) target = $region40
        $region39: #{tpu_custom_call.1} parent=11 // pred_region
          _
        $region40: #{tpu_custom_call.1} parent=11 // pred_fallthru
          _
        // Predicated region
        $region41: #{tpu_custom_call.1} parent=11 // pred_check
          %p444 = pneg %p266
        $region42: #{tpu_custom_call.1} parent=11 // pred_check_branch
          %446 = sbr.rel (%p444) target = $region44
        $region43: #{tpu_custom_call.1} parent=11 // pred_region
          _
        $region44: #{tpu_custom_call.1} parent=11 // pred_fallthru
          _
        // Predicated region
        $region45: #{tpu_custom_call.1} parent=11 // pred_check
          %p447 = pneg %p287
        $region46: #{tpu_custom_call.1} parent=11 // pred_check_branch
          %449 = sbr.rel (%p447) target = $region48
        $region47: #{tpu_custom_call.1} parent=11 // pred_region
          _
        $region48: #{tpu_custom_call.1} parent=11 // pred_fallthru
          _
        // Predicated region
        $region49: #{tpu_custom_call.1} parent=11 // pred_check
          %p450 = pneg %p308
        $region50: #{tpu_custom_call.1} parent=11 // pred_check_branch
          %452 = sbr.rel (%p450) target = $region52
        $region51: #{tpu_custom_call.1} parent=11 // pred_region
          _
        $region52: #{tpu_custom_call.1} parent=11 // pred_fallthru
          _
        // Predicated region
        $region53: #{tpu_custom_call.1} parent=11 // pred_check
          %p453 = pneg %p329
        $region54: #{tpu_custom_call.1} parent=11 // pred_check_branch
          %455 = sbr.rel (%p453) target = $region56
        $region55: #{tpu_custom_call.1} parent=11 // pred_region
          _
        $region56: #{tpu_custom_call.1} parent=11 // pred_fallthru
          _
        // Predicated region
        $region57: #{tpu_custom_call.1} parent=11 // pred_check
          %p456 = pneg %p350
        $region58: #{tpu_custom_call.1} parent=11 // pred_check_branch
          %458 = sbr.rel (%p456) target = $region60
        $region59: #{tpu_custom_call.1} parent=11 // pred_region
          _
        $region60: #{tpu_custom_call.1} parent=11 // pred_fallthru
          _
      $region12: #{tpu_custom_call.1} parent=5 // pred_fallthru
        _
      %p459 = scmp.lt.s32.totalorder %s28, 4
      // Predicated region
      $region61: #{tpu_custom_call.1} parent=5 // pred_check
        %p460 = pneg %p459
      $region62: #{tpu_custom_call.1} parent=5 // pred_check_branch
        %462 = sbr.rel (%p460) target = $region64
      $region63: #{tpu_custom_call.1} parent=5 // pred_region
        // Predicated region
        $region65: #{tpu_custom_call.1} parent=63 // pred_check
          %p463 = pneg %p62
        $region66: #{tpu_custom_call.1} parent=63 // pred_check_branch
          %465 = sbr.rel (%p463) target = $region68
        $region67: #{tpu_custom_call.1} parent=63 // pred_region
          %s466 = smul.u32 2, %s36
          %p467 = scmp.lt.s32.totalorder %s35, 1
          %s468 = scalar_select %p467, %s35, 1
          %p469 = scmp.lt.s32.totalorder %s466, 3
          %s470 = scalar_select %p469, %s466, 3
          %s471 = smul.addr %s468, 4
          %s472 = sadd.s32 %s470, %s471
          %s473 = smul.addr %s472, 8
          %s474 = scalar_lea.vmem %s0, %s473
          %s475 = smul.u32 2, %s36
        $region68: #{tpu_custom_call.1} parent=63 // pred_fallthru
          _
        // Predicated region
        $region69: #{tpu_custom_call.1} parent=63 // pred_check
          %p476 = pneg %p92
        $region70: #{tpu_custom_call.1} parent=63 // pred_check_branch
          %478 = sbr.rel (%p476) target = $region72
        $region71: #{tpu_custom_call.1} parent=63 // pred_region
          %s479 = smul.u32 %s35, 2
          %s480 = sadd.s32 %s479, %s36
          %p481 = scmp.lt.s32.totalorder %s480, 3
          %s482 = scalar_select %p481, %s480, 3
          %s483 = smul.addr %s482, 2
          %s484 = smul.addr %s483, 8
          %s485 = scalar_lea.vmem %s1, %s484
          %s486 = smul.u32 %s35, 2
          %s487 = sadd.s32 %s486, %s36
        $region72: #{tpu_custom_call.1} parent=63 // pred_fallthru
          _
      $region64: #{tpu_custom_call.1} parent=5 // pred_fallthru
        _
      %p488 = scmp.le.s32.totalorder 1, %s28
      %p489 = scmp.lt.s32.totalorder %s28, 5
      %p490 = pnand %p488, %p489
      %p491 = pneg %p490
      // Predicated region
      $region73: #{tpu_custom_call.1} parent=5 // pred_check
        _
      $region74: #{tpu_custom_call.1} parent=5 // pred_check_branch
        %493 = sbr.rel (%p490) target = $region76
      $region75: #{tpu_custom_call.1} parent=5 // pred_region
        %s494 = ssub.s32 %s28, 1
        %s495 = smul.u32 2, %s38
        %p496 = scmp.lt.s32.totalorder %s37, 1
        %s497 = scalar_select %p496, %s37, 1
        %p498 = scmp.lt.s32.totalorder %s495, 3
        %s499 = scalar_select %p498, %s495, 3
        %s500 = smul.addr %s497, 4
        %s501 = sadd.s32 %s499, %s500
        %s502 = smul.addr %s501, 8
        %s503 = scalar_lea.vmem %s0, %s502
        %p504 = pneg %p68
        %p505 = pneg %p65
        %s506 = smul.u32 %s37, 2
        %s507 = sadd.s32 %s506, %s38
        %p508 = scmp.lt.s32.totalorder %s507, 3
        %s509 = scalar_select %p508, %s507, 3
        %s510 = smul.addr %s509, 2
        %s511 = smul.addr %s510, 8
        %s512 = scalar_lea.vmem %s1, %s511
        %p513 = pneg %p98
        %p514 = pneg %p95
        %p515 = pneg %p119
        %p516 = pneg %p116
        %p517 = pneg %p140
        %p518 = pneg %p137
        %p519 = pneg %p161
        %p520 = pneg %p158
        %p521 = pneg %p182
        %p522 = pneg %p179
        %p523 = pneg %p203
        %p524 = pneg %p200
        %p525 = pneg %p224
        %p526 = pneg %p221
        %p527 = pneg %p245
        %p528 = pneg %p242
        %p529 = pneg %p266
        %p530 = pneg %p263
        %p531 = pneg %p287
        %p532 = pneg %p284
        %p533 = pneg %p308
        %p534 = pneg %p305
        %p535 = pneg %p329
        %p536 = pneg %p326
        %p537 = pneg %p350
        %p538 = pneg %p347
        %p539 = pneg %p378
        %p540 = pneg %p375
        %s541 = sand.u32 %s365, 1
        %s542 = scalar_lea.sflag [#allocation5], %s541
        %s543 = sand.u32 %s365, 1
        %s544 = smul.addr %s543, 8
        %s545 = scalar_lea.vmem [#allocation4], %s544
        %p546 = pneg %p408
        %p547 = pneg %p405
        %s548 = sand.u32 %s395, 1
        %s549 = scalar_lea.sflag [#allocation7], %s548
        %s550 = sand.u32 %s395, 1
        %s551 = scalar_lea.vmem [#allocation6], %s550
        %s552 = smul.u32 2, %s38
        %p553 = scmp.lt.s32.totalorder %s37, 1
        %s554 = scalar_select %p553, %s37, 1
        %p555 = scmp.lt.s32.totalorder %s552, 3
        %s556 = scalar_select %p555, %s552, 3
        %s557 = smul.addr %s554, 4
        %s558 = sadd.s32 %s556, %s557
        %s559 = smul.addr %s558, 8
        %s560 = scalar_lea.vmem %s0, %s559
        %s561 = smul.u32 2, %s38
        %s562 = smul.u32 %s37, 2
        %s563 = sadd.s32 %s562, %s38
        %p564 = scmp.lt.s32.totalorder %s563, 3
        %s565 = scalar_select %p564, %s563, 3
        %s566 = smul.addr %s565, 2
        %s567 = smul.addr %s566, 8
        %s568 = scalar_lea.vmem %s1, %s567
        %s569 = smul.u32 %s37, 2
        %s570 = sadd.s32 %s569, %s38
        %s571 = smul.u32 2, %s38
        %s572 = smul.u32 %s37, 2
        %s573 = sadd.s32 %s572, %s38
        %s575 = smul.u32 %s38, 16
        %v576 = vlaneseq
        %v577 = vshrl.u32 %v576, 7
        %v578 = vadd.s32 %v577, 8
        %v579 = vstv %s575
        %v580 = vadd.s32 %v577, %v579
        %v581 = vadd.s32 %v578, %v579
        %vm582 = vcmp.lt.s32.totalorder %v580, 24
        %vm583 = vcmp.lt.s32.totalorder %v581, 24
        %v584 = vld [vmem:[%s2] sm:$0xf]
        %v585 = vld [vmem:[%s2 + $0x4] sm:$0xf]
        %v586 = vld [vmem:[%s560] sm:$0xff]
        %v587 = vld [vmem:[%s560 + $0x8] sm:$0xff]
        %v588 = vpack.c.bf16 %v587, %v586
        %v589 = vld [vmem:[%s3] sm:$0x1]
        %v591 = vlaneseq
        %v592 = vshrl.u32 %v591, 7
        %v593 = vsub.s32 0, %v592
        %v594 = vrot.slane %v589, %v593
        %v598 = vunpack.c.l.b16 %v584
        %v599 = vunpack.c.l.b16 %v585
        %v600 = vpack.c.b16 %v599, %v598
        %vm602 = vcmask 130048
        %v604 = vsel %vm602, %v588, 0
        %606 = vmatprep.subr.bf16.mxu0 0
        %607 = vmatpush1.bf16.msra.mxu0 0
        %608 = vmatprep.subr.bf16.mxu0 0
        %609 = vmatpush1.bf16.msra.mxu0 0
        %610 = vmatprep.subr.bf16.mxu0 0
        %611 = vmatpush1.bf16.msra.mxu0 0
        %612 = vmatprep.subr.bf16.mxu0 0
        %613 = vmatpush1.bf16.msra.mxu0 0
        %614 = vmatprep.subr.bf16.mxu0 0
        %615 = vmatpush1.bf16.msra.mxu0 0
        %616 = vmatprep.subr.bf16.mxu0 0
        %617 = vmatpush1.bf16.msra.mxu0 0
        %618 = vmatprep.subr.bf16.mxu0 0
        %619 = vmatpush1.bf16.msra.mxu0 0
        %620 = vmatprep.subr.bf16.mxu0 0
        %621 = vmatpush1.bf16.msra.mxu0 %v600
        %622 = vmatprep.subr.bf16.mxu0 0
        %623 = vmatpush2.bf16.msra.mxu0 0
        %624 = vmatprep.subr.bf16.mxu0 0
        %625 = vmatpush2.bf16.msra.mxu0 0
        %626 = vmatprep.subr.bf16.mxu0 0
        %627 = vmatpush2.bf16.msra.mxu0 0
        %628 = vmatprep.subr.bf16.mxu0 0
        %629 = vmatpush2.bf16.msra.mxu0 0
        %630 = vmatprep.subr.bf16.mxu0 0
        %631 = vmatpush2.bf16.msra.mxu0 0
        %632 = vmatprep.subr.bf16.mxu0 0
        %633 = vmatpush2.bf16.msra.mxu0 0
        %634 = vmatprep.subr.bf16.mxu0 0
        %635 = vmatpush2.bf16.msra.mxu0 0
        %636 = vmatprep.subr.bf16.mxu0 0
        %637 = vmatpush2.bf16.msra.mxu0 0
        %638 = vmatprep.mubr.bf16.mxu0 0
        %639 = vmatmul.mubr.bf16.gmra.mxu0 %v604
        %v640 = vpop.f32.mrf.mxu0
        %v641 = vadd.f32 %v594, %v640
        %v642 = vpop.f32.mrf.mxu0
        %v643 = vpop.f32.mrf.mxu0
        %v644 = vadd.f32 %v594, %v643
        %v645 = vpop.f32.mrf.mxu0
        %646 = vdwg.mxu0
        %v647 = vmax.f32 %v641, 0.0
        %v648 = vmax.f32 %v644, 0.0
        %v649 = vld [vmem:[%s4] sm:$0x1]
        %v651 = vlaneseq
        %v652 = vshrl.u32 %v651, 7
        %v653 = vsub.s32 0, %v652
        %v654 = vrot.slane %v649, %v653
        %v656 = vmul.f32 %v647, %v654
        %v657 = vmul.f32 %v648, %v654
        %v658 = vld [vmem:[%s5] sm:$0x1]
        %v660 = vlaneseq
        %v661 = vshrl.u32 %v660, 7
        %v662 = vsub.s32 0, %v661
        %v663 = vrot.slane %v658, %v662
        %v665 = vadd.f32 %v656, %v663
        %v666 = vadd.f32 %v657, %v663
        %vm667 = vcmp.lt.s32.totalorder %v577, 6
        %vm668 = vcmp.lt.s32.totalorder %v578, 6
        %s669 = ssub.s32 %s575, 6
        %v670 = vstv %s669
        %v671 = vadd.s32 %v670, %v577
        %v672 = vadd.s32 %v670, %v578
        %s673 = sadd.s32 %s575, 10
        %v674 = vstv %s673
        %v675 = vadd.s32 %v674, %v577
        %v676 = vadd.s32 %v674, %v578
        %v677 = vsel %vm667, %v671, %v675
        %v678 = vsel %vm668, %v672, %v676
        %vm679 = vcmp.ge.s32.totalorder %v677, 0
        %vm680 = vcmp.ge.s32.totalorder %v678, 0
        %vm681 = vcmp.lt.s32.totalorder %v677, 24
        %vm682 = vcmp.lt.s32.totalorder %v678, 24
        %vm683 = vmand %vm679, %vm681
        %vm684 = vmand %vm680, %vm682
        %v685 = vld [vmem:[%s568] sm:$0xff]
        %v686 = vld [vmem:[%s568 + $0x8] sm:$0xf]
        %v687 = vpack.c.bf16 %v686, %v685
        %v689 = vsel %vm602, %v687, 0
        %691 = vmatprep.subr.bf16.mxu0 0
        %692 = vmatpush1.bf16.msra.mxu0 0
        %693 = vmatprep.subr.bf16.mxu0 0
        %694 = vmatpush1.bf16.msra.mxu0 0
        %695 = vmatprep.subr.bf16.mxu0 0
        %696 = vmatpush1.bf16.msra.mxu0 0
        %697 = vmatprep.subr.bf16.mxu0 0
        %698 = vmatpush1.bf16.msra.mxu0 0
        %699 = vmatprep.subr.bf16.mxu0 0
        %700 = vmatpush1.bf16.msra.mxu0 0
        %701 = vmatprep.subr.bf16.mxu0 0
        %702 = vmatpush1.bf16.msra.mxu0 0
        %703 = vmatprep.subr.bf16.mxu0 0
        %704 = vmatpush1.bf16.msra.mxu0 0
        %705 = vmatprep.subr.bf16.mxu0 0
        %706 = vmatpush1.bf16.msra.mxu0 %v600
        %707 = vmatprep.subr.bf16.mxu0 0
        %708 = vmatpush2.bf16.msra.mxu0 0
        %709 = vmatprep.subr.bf16.mxu0 0
        %710 = vmatpush2.bf16.msra.mxu0 0
        %711 = vmatprep.subr.bf16.mxu0 0
        %712 = vmatpush2.bf16.msra.mxu0 0
        %713 = vmatprep.subr.bf16.mxu0 0
        %714 = vmatpush2.bf16.msra.mxu0 0
        %715 = vmatprep.subr.bf16.mxu0 0
        %716 = vmatpush2.bf16.msra.mxu0 0
        %717 = vmatprep.subr.bf16.mxu0 0
        %718 = vmatpush2.bf16.msra.mxu0 0
        %719 = vmatprep.subr.bf16.mxu0 0
        %720 = vmatpush2.bf16.msra.mxu0 0
        %721 = vmatprep.subr.bf16.mxu0 0
        %722 = vmatpush2.bf16.msra.mxu0 0
        %723 = vmatprep.mubr.bf16.mxu0 0
        %724 = vmatmul.mubr.bf16.gmra.mxu0 %v689
        %v725 = vpop.f32.mrf.mxu0
        %v726 = vadd.f32 %v594, %v725
        %v727 = vpop.f32.mrf.mxu0
        %v728 = vpop.f32.mrf.mxu0
        %v729 = vadd.f32 %v594, %v728
        %v730 = vpop.f32.mrf.mxu0
        %731 = vdwg.mxu0
        %v732 = vmax.f32 %v726, 0.0
        %v733 = vmax.f32 %v729, 0.0
        %v734 = vmul.f32 %v732, %v654
        %v735 = vmul.f32 %v733, %v654
        %v736 = vadd.f32 %v734, %v663
        %v737 = vadd.f32 %v735, %v663
        %vm738 = vcmask 188416
        %739 = vst.msk [vmem:[#allocation2 + $0x8] sm:$0x1] %vm738, 0
        %vm740 = vcmask 189441
        %741 = vst.msk [vmem:[#allocation2 + $0x14] sm:$0x2] %vm740, 0
        %v742 = vsel %vm582, 1, 0
        %v743 = vsel %vm583, 1, 0
        %vm744 = vcmp.eq.s32.totalorder %v742, 1
        %vm745 = vcmp.eq.s32.totalorder %v743, 1
        %v746 = vsel %vm744, %v665, 0.0
        %v747 = vsel %vm745, %v666, 0.0
        %v748 = vpack.c.bf16 %v747, %v746
        %v749 = vsel %vm683, 1, 0
        %vm750 = vcmp.eq.s32.totalorder %v749, 1
        %v751 = vsel %vm750, %v736, 0.0
        %v752 = vpack.c.bf16 %v751, %v751
        %v753 = vsel %vm684, 1, 0
        %vm754 = vcmp.eq.s32.totalorder %v753, 1
        %v755 = vsel %vm754, %v737, 0.0
        %v756 = vpack.c.bf16 %v755, %v751
        %v758 = vunpack.c.l.b16 %v748
        %v759 = vunpack.c.h.b16 %v748
        %v760 = vpack.c.b16 %v758, %v758
        %v761 = vpack.c.b16 %v759, %v759
        %vm764 = vcmask 60416
        %765 = vst.msk [vmem:[#allocation2 + $0xc] sm:$0xf] %vm764, %v760
        %766 = vst.msk [vmem:[#allocation2 + $0x10] sm:$0xf] %vm764, %v761
        %v768 = vunpack.c.l.b16 %v752
        %v769 = vpack.c.b16 %v768, %v768
        %v770 = vrot.slane %v769, 7
        %vm772 = vcmask 60417
        %773 = vst.msk [vmem:[#allocation2 + $0x8] sm:$0xe] %vm772, %v770
        %v775 = vunpack.c.l.b16 %v756
        %v776 = vunpack.c.h.b16 %v756
        %v777 = vpack.c.b16 %v775, %v775
        %v778 = vpack.c.b16 %v776, %v776
        %vm779 = vcmask 1040384
        %vm780 = vcmask 1044484
        %vm781 = vmor %vm779, %vm780
        %v782 = vrot.slane %v777, 7
        %v783 = vrot.slane %v782, 4
        %v784 = vrot.slane %v778, 7
        %v785 = vsel %vm781, %v783, %v784
        %vm787 = vcmask 59392
        %788 = vst.msk [vmem:[#allocation2 + $0x14] sm:$0x7] %vm787, %v785
        %vm789 = vcmask 1042432
        %vm790 = vcmask 1046532
        %vm791 = vmor %vm789, %vm790
        %v792 = vrot.slane %v760, 5
        %v793 = vrot.slane %v792, 4
        %v794 = vrot.slane %v761, 5
        %v795 = vsel %vm791, %v793, %v794
        %v796 = vrot.slane %v794, 4
        %797 = vrot.lane.b32.xlu0 %v792, 8
        %v798 = vpop.permute.xlu0 %797
        %799 = vrot.lane.b32.xlu0 %v795, 8
        %v800 = vpop.permute.xlu0 %799
        %801 = vrot.lane.b32.xlu0 %v796, 8
        %v802 = vpop.permute.xlu0 %801
        %vm806 = vcmask 126019
        %807 = vst.msk [vmem:[#allocation2 + $0x8] sm:$0x8] %vm806, %v798
        %vm808 = vcmask 126016
        %809 = vst.msk [vmem:[#allocation2 + $0xc] sm:$0xf] %vm808, %v800
        %vm810 = vcmask 124992
        %811 = vst.msk [vmem:[#allocation2 + $0x10] sm:$0x7] %vm810, %v802
        %812 = vrot.lane.b32.xlu0 %v769, 8
        %v813 = vpop.permute.xlu0 %812
        %815 = vst.msk [vmem:[#allocation2 + $0x8] sm:$0x7] %vm810, %v813
        %816 = vrot.lane.b32.xlu0 %v777, 8
        %v817 = vpop.permute.xlu0 %816
        %818 = vrot.lane.b32.xlu0 %v778, 8
        %v819 = vpop.permute.xlu0 %818
        %822 = vst.msk [vmem:[#allocation2 + $0x10] sm:$0x8] %vm806, %v817
        %vm823 = vcmask 123968
        %824 = vst.msk [vmem:[#allocation2 + $0x14] sm:$0x3] %vm823, %v819
        %vm825 = vcmask 1041408
        %vm826 = vcmask 1045508
        %vm827 = vmor %vm825, %vm826
        %v828 = vrot.slane %v760, 6
        %v829 = vrot.slane %v828, 4
        %v830 = vrot.slane %v761, 6
        %v831 = vsel %vm827, %v829, %v830
        %v832 = vrot.slane %v830, 4
        %833 = vrot.lane.b32.xlu0 %v828, 16
        %v834 = vpop.permute.xlu0 %833
        %835 = vrot.lane.b32.xlu0 %v831, 16
        %v836 = vpop.permute.xlu0 %835
        %837 = vrot.lane.b32.xlu0 %v832, 16
        %v838 = vpop.permute.xlu0 %837
        %vm842 = vcmask 191618
        %843 = vst.msk [vmem:[#allocation2 + $0x8] sm:$0xc] %vm842, %v834
        %vm844 = vcmask 191616
        %845 = vst.msk [vmem:[#allocation2 + $0xc] sm:$0xf] %vm844, %v836
        %vm846 = vcmask 189568
        %847 = vst.msk [vmem:[#allocation2 + $0x10] sm:$0x3] %vm846, %v838
        %v848 = vrot.slane %v769, 5
        %v849 = vrot.slane %v848, 4
        %850 = vrot.lane.b32.xlu0 %v848, 16
        %v851 = vpop.permute.xlu0 %850
        %852 = vrot.lane.b32.xlu0 %v849, 16
        %v853 = vpop.permute.xlu0 %852
        %vm856 = vcmask 191619
        %857 = vst.msk [vmem:[#allocation2 + $0x4] sm:$0x8] %vm856, %v851
        %858 = vst.msk [vmem:[#allocation2 + $0x8] sm:$0x3] %vm846, %v853
        %v859 = vrot.slane %v777, 5
        %v860 = vrot.slane %v859, 4
        %v861 = vrot.slane %v778, 5
        %v862 = vsel %vm791, %v860, %v861
        %v863 = vrot.slane %v861, 4
        %864 = vrot.lane.b32.xlu0 %v862, 16
        %v865 = vpop.permute.xlu0 %864
        %866 = vrot.lane.b32.xlu0 %v863, 16
        %v867 = vpop.permute.xlu0 %866
        %870 = vst.msk [vmem:[#allocation2 + $0x10] sm:$0xc] %vm842, %v865
        %vm871 = vcmask 188544
        %872 = vst.msk [vmem:[#allocation2 + $0x14] sm:$0x1] %vm871, %v867
        %v873 = vld [vmem:[#allocation2 + $0x8] sm:$0xf]
        %v874 = vld [vmem:[#allocation2 + $0xc] sm:$0xf]
        %v875 = vld [vmem:[#allocation2 + $0x10] sm:$0xf]
        %v876 = vld [vmem:[#allocation2 + $0x14] sm:$0x3]
        %v877 = vld [vmem:[%s6] sm:$0xf]
        %v878 = vld [vmem:[%s6 + $0x4] sm:$0xf]
        %v879 = vld [vmem:[%s6 + $0x8] sm:$0xf]
        %v880 = vld [vmem:[%s7] sm:$0x1]
        %v881 = vlaneseq
        %v882 = vshrl.u32 %v881, 7
        %v883 = vsub.s32 0, %v882
        %v884 = vrot.slane %v880, %v883
        %v889 = vunpack.c.l.b16 %v873
        %v890 = vunpack.c.l.b16 %v874
        %v891 = vunpack.c.l.b16 %v875
        %v892 = vunpack.c.l.b16 %v876
        %v893 = vpack.c.b16 %v890, %v889
        %v894 = vpack.c.b16 %v892, %v891
        %v898 = vunpack.c.l.b16 %v877
        %v899 = vunpack.c.l.b16 %v878
        %v900 = vunpack.c.l.b16 %v879
        %v901 = vpack.c.b16 %v899, %v898
        %v902 = vpack.c.b16 %v900, %v900
        %vm904 = vcmask 195584
        %v906 = vsel %vm904, %v893, 0
        %v909 = vsel %vm904, %v894, 0
        %vm911 = vcmask 1043456
        %v913 = vsel %vm911, %v902, 0
        %915 = vmatprep.subr.bf16.mxu0 0
        %916 = vmatpush1.bf16.msra.mxu0 0
        %917 = vmatprep.subr.bf16.mxu0 0
        %918 = vmatpush1.bf16.msra.mxu0 0
        %919 = vmatprep.subr.bf16.mxu0 0
        %920 = vmatpush1.bf16.msra.mxu0 0
        %921 = vmatprep.subr.bf16.mxu0 0
        %922 = vmatpush1.bf16.msra.mxu0 0
        %923 = vmatprep.subr.bf16.mxu0 0
        %924 = vmatpush1.bf16.msra.mxu0 0
        %925 = vmatprep.subr.bf16.mxu0 0
        %926 = vmatpush1.bf16.msra.mxu0 0
        %927 = vmatprep.subr.bf16.mxu0 0
        %928 = vmatpush1.bf16.msra.mxu0 %v913
        %929 = vmatprep.subr.bf16.mxu0 0
        %930 = vmatpush1.bf16.msra.mxu0 %v901
        %931 = vmatprep.subr.bf16.mxu0 0
        %932 = vmatpush2.bf16.msra.mxu0 0
        %933 = vmatprep.subr.bf16.mxu0 0
        %934 = vmatpush2.bf16.msra.mxu0 0
        %935 = vmatprep.subr.bf16.mxu0 0
        %936 = vmatpush2.bf16.msra.mxu0 0
        %937 = vmatprep.subr.bf16.mxu0 0
        %938 = vmatpush2.bf16.msra.mxu0 0
        %939 = vmatprep.subr.bf16.mxu0 0
        %940 = vmatpush2.bf16.msra.mxu0 0
        %941 = vmatprep.subr.bf16.mxu0 0
        %942 = vmatpush2.bf16.msra.mxu0 0
        %943 = vmatprep.subr.bf16.mxu0 0
        %944 = vmatpush2.bf16.msra.mxu0 0
        %945 = vmatprep.subr.bf16.mxu0 0
        %946 = vmatpush2.bf16.msra.mxu0 0
        %947 = vmatprep.mubr.bf16.mxu0 0
        %948 = vmatmul.mubr.bf16.gmra.mxu0 %v906
        %v949 = vpop.f32.mrf.mxu0
        %v950 = vadd.f32 %v884, %v949
        %v951 = vpop.f32.mrf.mxu0
        %v952 = vpop.f32.mrf.mxu0
        %v953 = vadd.f32 %v884, %v952
        %v954 = vpop.f32.mrf.mxu0
        %955 = vmatprep.mubr.bf16.mxu0 0
        %956 = vmatmul.mubr.bf16.gmra.mxu0 %v909
        %v957 = vpop.f32.mrf.mxu0
        %v958 = vadd.f32 %v884, %v957
        %v959 = vpop.f32.mrf.mxu0
        %v960 = vpop.f32.mrf.mxu0
        %v961 = vadd.f32 %v884, %v960
        %v962 = vpop.f32.mrf.mxu0
        %963 = vdwg.mxu0
        %v964 = vmax.f32 %v950, 0.0
        %v965 = vmax.f32 %v953, 0.0
        %v966 = vmax.f32 %v958, 0.0
        %v967 = vmax.f32 %v961, 0.0
        %v968 = vld [vmem:[%s8] sm:$0x1]
        %v969 = vlaneseq
        %v970 = vshrl.u32 %v969, 7
        %v971 = vsub.s32 0, %v970
        %v972 = vrot.slane %v968, %v971
        %v973 = vmul.f32 %v964, %v972
        %v974 = vmul.f32 %v965, %v972
        %v975 = vmul.f32 %v966, %v972
        %v976 = vmul.f32 %v967, %v972
        %v977 = vld [vmem:[%s9] sm:$0x1]
        %v978 = vlaneseq
        %v979 = vshrl.u32 %v978, 7
        %v980 = vsub.s32 0, %v979
        %v981 = vrot.slane %v977, %v980
        %v982 = vadd.f32 %v973, %v981
        %v983 = vadd.f32 %v974, %v981
        %v984 = vadd.f32 %v975, %v981
        %v985 = vadd.f32 %v976, %v981
        %v986 = vpack.c.bf16 %v983, %v982
        %v987 = vpack.c.bf16 %v984, %v984
        %v990 = vunpack.c.l.b16 %v986
        %v991 = vunpack.c.h.b16 %v986
        %v992 = vunpack.c.l.b16 %v987
        %v993 = vpack.c.b16 %v990, %v990
        %v994 = vpack.c.b16 %v991, %v991
        %v995 = vpack.c.b16 %v992, %v992
        %v996 = vrot.slane %v993, 7
        %v997 = vrot.slane %v996, 4
        %v998 = vrot.slane %v994, 7
        %v999 = vsel %vm781, %v997, %v998
        %v1000 = vrot.slane %v998, 4
        %v1001 = vrot.slane %v995, 7
        %v1002 = vsel %vm781, %v1000, %v1001
        %1005 = vst.msk [vmem:[#allocation3] sm:$0xf] %vm764, %v999
        %1006 = vst.msk [vmem:[#allocation3 + $0x4] sm:$0xf] %vm764, %v1002
        %vm1009 = vcmask 1045504
        %v1010 = vrot.slane %v665, 2
        %v1011 = vrot.slane %v666, 2
        %v1012 = vsel %vm1009, %v1010, %v1011
        %1013 = vrot.lane.b32.xlu0 %v1010, 120
        %v1014 = vpop.permute.xlu0 %1013
        %1015 = vrot.lane.b32.xlu0 %v1012, 120
        %v1016 = vpop.permute.xlu0 %1015
        %1017 = vrot.lane.b32.xlu0 %v1011, 120
        %v1018 = vpop.permute.xlu0 %1017
        %v1022 = vadd.f32 %v982, %v1014
        %v1023 = vadd.f32 %v983, %v1016
        %v1024 = vadd.f32 %v984, %v1018
        %vm1028 = vcmask 1041408
        %v1029 = vrot.slane %v1022, 6
        %v1030 = vrot.slane %v1023, 6
        %v1031 = vsel %vm1028, %v1029, %v1030
        %v1032 = vrot.slane %v1024, 6
        %v1033 = vsel %vm1028, %v1030, %v1032
        %v1036 = vsel %vm744, %v1031, 0.0
        %v1037 = vsel %vm745, %v1033, 0.0
        %v1038 = vpack.c.bf16 %v1037, %v1036
        %1040 = vrot.lane.b32.xlu0 %v736, 120
        %v1041 = vpop.permute.xlu0 %1040
        %v1043 = vadd.f32 %v982, %v1041
        %1045 = vrot.lane.b32.xlu0 %v737, 120
        %v1046 = vpop.permute.xlu0 %1045
        %v1048 = vadd.f32 %v984, %v1041
        %v1049 = vadd.f32 %v985, %v1046
        %v1050 = vsel %vm750, %v1043, 0.0
        %v1051 = vpack.c.bf16 %v1050, %v1050
        %v1052 = vsel %vm750, %v1048, 0.0
        %v1053 = vsel %vm754, %v1049, 0.0
        %v1054 = vpack.c.bf16 %v1053, %v1052
        %v1056 = vunpack.c.l.b16 %v1038
        %v1057 = vunpack.c.h.b16 %v1038
        %v1058 = vpack.c.b16 %v1056, %v1056
        %v1059 = vpack.c.b16 %v1057, %v1057
        %1062 = vst.msk [vmem:[#allocation2 + $0xc] sm:$0xf] %vm764, %v1058
        %1063 = vst.msk [vmem:[#allocation2 + $0x10] sm:$0xf] %vm764, %v1059
        %v1065 = vunpack.c.l.b16 %v1051
        %v1066 = vpack.c.b16 %v1065, %v1065
        %v1067 = vrot.slane %v1066, 7
        %1069 = vst.msk [vmem:[#allocation2 + $0x8] sm:$0xe] %vm772, %v1067
        %v1071 = vunpack.c.l.b16 %v1054
        %v1072 = vunpack.c.h.b16 %v1054
        %v1073 = vpack.c.b16 %v1071, %v1071
        %v1074 = vpack.c.b16 %v1072, %v1072
        %v1075 = vrot.slane %v1073, 7
        %v1076 = vrot.slane %v1075, 4
        %v1077 = vrot.slane %v1074, 7
        %v1078 = vsel %vm781, %v1076, %v1077
        %1080 = vst.msk [vmem:[#allocation2 + $0x14] sm:$0x7] %vm787, %v1078
        %v1081 = vrot.slane %v1058, 5
        %v1082 = vrot.slane %v1081, 4
        %v1083 = vrot.slane %v1059, 5
        %v1084 = vsel %vm791, %v1082, %v1083
        %v1085 = vrot.slane %v1083, 4
        %1086 = vrot.lane.b32.xlu0 %v1081, 8
        %v1087 = vpop.permute.xlu0 %1086
        %1088 = vrot.lane.b32.xlu0 %v1084, 8
        %v1089 = vpop.permute.xlu0 %1088
        %1090 = vrot.lane.b32.xlu0 %v1085, 8
        %v1091 = vpop.permute.xlu0 %1090
        %1095 = vst.msk [vmem:[#allocation2 + $0x8] sm:$0x8] %vm806, %v1087
        %1096 = vst.msk [vmem:[#allocation2 + $0xc] sm:$0xf] %vm808, %v1089
        %1097 = vst.msk [vmem:[#allocation2 + $0x10] sm:$0x7] %vm810, %v1091
        %1098 = vrot.lane.b32.xlu0 %v1066, 8
        %v1099 = vpop.permute.xlu0 %1098
        %1101 = vst.msk [vmem:[#allocation2 + $0x8] sm:$0x7] %vm810, %v1099
        %1102 = vrot.lane.b32.xlu0 %v1073, 8
        %v1103 = vpop.permute.xlu0 %1102
        %1104 = vrot.lane.b32.xlu0 %v1074, 8
        %v1105 = vpop.permute.xlu0 %1104
        %1108 = vst.msk [vmem:[#allocation2 + $0x10] sm:$0x8] %vm806, %v1103
        %1109 = vst.msk [vmem:[#allocation2 + $0x14] sm:$0x3] %vm823, %v1105
        %v1110 = vrot.slane %v1058, 6
        %v1111 = vrot.slane %v1110, 4
        %v1112 = vrot.slane %v1059, 6
        %v1113 = vsel %vm827, %v1111, %v1112
        %v1114 = vrot.slane %v1112, 4
        %1115 = vrot.lane.b32.xlu0 %v1110, 16
        %v1116 = vpop.permute.xlu0 %1115
        %1117 = vrot.lane.b32.xlu0 %v1113, 16
        %v1118 = vpop.permute.xlu0 %1117
        %1119 = vrot.lane.b32.xlu0 %v1114, 16
        %v1120 = vpop.permute.xlu0 %1119
        %1124 = vst.msk [vmem:[#allocation2 + $0x8] sm:$0xc] %vm842, %v1116
        %1125 = vst.msk [vmem:[#allocation2 + $0xc] sm:$0xf] %vm844, %v1118
        %1126 = vst.msk [vmem:[#allocation2 + $0x10] sm:$0x3] %vm846, %v1120
        %v1127 = vrot.slane %v1066, 5
        %v1128 = vrot.slane %v1127, 4
        %1129 = vrot.lane.b32.xlu0 %v1127, 16
        %v1130 = vpop.permute.xlu0 %1129
        %1131 = vrot.lane.b32.xlu0 %v1128, 16
        %v1132 = vpop.permute.xlu0 %1131
        %1135 = vst.msk [vmem:[#allocation2 + $0x4] sm:$0x8] %vm856, %v1130
        %1136 = vst.msk [vmem:[#allocation2 + $0x8] sm:$0x3] %vm846, %v1132
        %v1137 = vrot.slane %v1073, 5
        %v1138 = vrot.slane %v1137, 4
        %v1139 = vrot.slane %v1074, 5
        %v1140 = vsel %vm791, %v1138, %v1139
        %v1141 = vrot.slane %v1139, 4
        %1142 = vrot.lane.b32.xlu0 %v1140, 16
        %v1143 = vpop.permute.xlu0 %1142
        %1144 = vrot.lane.b32.xlu0 %v1141, 16
        %v1145 = vpop.permute.xlu0 %1144
        %1148 = vst.msk [vmem:[#allocation2 + $0x10] sm:$0xc] %vm842, %v1143
        %1149 = vst.msk [vmem:[#allocation2 + $0x14] sm:$0x1] %vm871, %v1145
        %v1150 = vld [vmem:[#allocation2 + $0x8] sm:$0xf]
        %v1151 = vld [vmem:[#allocation2 + $0xc] sm:$0xf]
        %v1152 = vld [vmem:[#allocation2 + $0x10] sm:$0xf]
        %v1153 = vld [vmem:[#allocation2 + $0x14] sm:$0x3]
        %s1154 = scalar_lea.vmem %s6, 12
        %v1155 = vld [vmem:[%s1154] sm:$0xf]
        %v1156 = vld [vmem:[%s1154 + $0x4] sm:$0xf]
        %v1157 = vld [vmem:[%s1154 + $0x8] sm:$0xf]
        %v1158 = vld [vmem:[%s7 + $0x1] sm:$0x1]
        %v1159 = vlaneseq
        %v1160 = vshrl.u32 %v1159, 7
        %v1161 = vsub.s32 0, %v1160
        %v1162 = vrot.slane %v1158, %v1161
        %v1167 = vunpack.c.l.b16 %v1150
        %v1168 = vunpack.c.l.b16 %v1151
        %v1169 = vunpack.c.l.b16 %v1152
        %v1170 = vunpack.c.l.b16 %v1153
        %v1171 = vpack.c.b16 %v1168, %v1167
        %v1172 = vpack.c.b16 %v1170, %v1169
        %v1176 = vunpack.c.l.b16 %v1155
        %v1177 = vunpack.c.l.b16 %v1156
        %v1178 = vunpack.c.l.b16 %v1157
        %v1179 = vpack.c.b16 %v1177, %v1176
        %v1180 = vpack.c.b16 %v1178, %v1178
        %v1183 = vsel %vm904, %v1171, 0
        %v1186 = vsel %vm904, %v1172, 0
        %v1189 = vsel %vm911, %v1180, 0
        %1191 = vmatprep.subr.bf16.mxu0 0
        %1192 = vmatpush1.bf16.msra.mxu0 0
        %1193 = vmatprep.subr.bf16.mxu0 0
        %1194 = vmatpush1.bf16.msra.mxu0 0
        %1195 = vmatprep.subr.bf16.mxu0 0
        %1196 = vmatpush1.bf16.msra.mxu0 0
        %1197 = vmatprep.subr.bf16.mxu0 0
        %1198 = vmatpush1.bf16.msra.mxu0 0
        %1199 = vmatprep.subr.bf16.mxu0 0
        %1200 = vmatpush1.bf16.msra.mxu0 0
        %1201 = vmatprep.subr.bf16.mxu0 0
        %1202 = vmatpush1.bf16.msra.mxu0 0
        %1203 = vmatprep.subr.bf16.mxu0 0
        %1204 = vmatpush1.bf16.msra.mxu0 %v1189
        %1205 = vmatprep.subr.bf16.mxu0 0
        %1206 = vmatpush1.bf16.msra.mxu0 %v1179
        %1207 = vmatprep.subr.bf16.mxu0 0
        %1208 = vmatpush2.bf16.msra.mxu0 0
        %1209 = vmatprep.subr.bf16.mxu0 0
        %1210 = vmatpush2.bf16.msra.mxu0 0
        %1211 = vmatprep.subr.bf16.mxu0 0
        %1212 = vmatpush2.bf16.msra.mxu0 0
        %1213 = vmatprep.subr.bf16.mxu0 0
        %1214 = vmatpush2.bf16.msra.mxu0 0
        %1215 = vmatprep.subr.bf16.mxu0 0
        %1216 = vmatpush2.bf16.msra.mxu0 0
        %1217 = vmatprep.subr.bf16.mxu0 0
        %1218 = vmatpush2.bf16.msra.mxu0 0
        %1219 = vmatprep.subr.bf16.mxu0 0
        %1220 = vmatpush2.bf16.msra.mxu0 0
        %1221 = vmatprep.subr.bf16.mxu0 0
        %1222 = vmatpush2.bf16.msra.mxu0 0
        %1223 = vmatprep.mubr.bf16.mxu0 0
        %1224 = vmatmul.mubr.bf16.gmra.mxu0 %v1183
        %v1225 = vpop.f32.mrf.mxu0
        %v1226 = vadd.f32 %v1162, %v1225
        %v1227 = vpop.f32.mrf.mxu0
        %v1228 = vpop.f32.mrf.mxu0
        %v1229 = vadd.f32 %v1162, %v1228
        %v1230 = vpop.f32.mrf.mxu0
        %1231 = vmatprep.mubr.bf16.mxu0 0
        %1232 = vmatmul.mubr.bf16.gmra.mxu0 %v1186
        %v1233 = vpop.f32.mrf.mxu0
        %v1234 = vadd.f32 %v1162, %v1233
        %v1235 = vpop.f32.mrf.mxu0
        %v1236 = vpop.f32.mrf.mxu0
        %v1237 = vadd.f32 %v1162, %v1236
        %v1238 = vpop.f32.mrf.mxu0
        %1239 = vdwg.mxu0
        %v1240 = vmax.f32 %v1226, 0.0
        %v1241 = vmax.f32 %v1229, 0.0
        %v1242 = vmax.f32 %v1234, 0.0
        %v1243 = vmax.f32 %v1237, 0.0
        %v1244 = vld [vmem:[%s8 + $0x1] sm:$0x1]
        %v1245 = vlaneseq
        %v1246 = vshrl.u32 %v1245, 7
        %v1247 = vsub.s32 0, %v1246
        %v1248 = vrot.slane %v1244, %v1247
        %v1249 = vmul.f32 %v1240, %v1248
        %v1250 = vmul.f32 %v1241, %v1248
        %v1251 = vmul.f32 %v1242, %v1248
        %v1252 = vmul.f32 %v1243, %v1248
        %v1253 = vld [vmem:[%s9 + $0x1] sm:$0x1]
        %v1254 = vlaneseq
        %v1255 = vshrl.u32 %v1254, 7
        %v1256 = vsub.s32 0, %v1255
        %v1257 = vrot.slane %v1253, %v1256
        %v1258 = vadd.f32 %v1249, %v1257
        %v1259 = vadd.f32 %v1250, %v1257
        %v1260 = vadd.f32 %v1251, %v1257
        %v1261 = vadd.f32 %v1252, %v1257
        %v1262 = vpack.c.bf16 %v1259, %v1258
        %v1263 = vpack.c.bf16 %v1260, %v1260
        %v1266 = vunpack.c.l.b16 %v1262
        %v1267 = vunpack.c.h.b16 %v1262
        %v1268 = vunpack.c.l.b16 %v1263
        %v1269 = vpack.c.b16 %v1266, %v1266
        %v1270 = vpack.c.b16 %v1267, %v1267
        %v1271 = vpack.c.b16 %v1268, %v1268
        %v1272 = vrot.slane %v1269, 7
        %v1273 = vrot.slane %v1272, 4
        %v1274 = vrot.slane %v1270, 7
        %v1275 = vsel %vm781, %v1273, %v1274
        %v1276 = vrot.slane %v1274, 4
        %v1277 = vrot.slane %v1271, 7
        %v1278 = vsel %vm781, %v1276, %v1277
        %1279 = vrot.lane.b32.xlu0 %v1275, 8
        %v1280 = vpop.permute.xlu0 %1279
        %1281 = vrot.lane.b32.xlu0 %v1278, 8
        %v1282 = vpop.permute.xlu0 %1281
        %1285 = vst.msk [vmem:[#allocation3] sm:$0xf] %vm808, %v1280
        %1286 = vst.msk [vmem:[#allocation3 + $0x4] sm:$0xf] %vm808, %v1282
        %1287 = vrot.lane.b32.xlu0 %v1010, 112
        %v1288 = vpop.permute.xlu0 %1287
        %1289 = vrot.lane.b32.xlu0 %v1012, 112
        %v1290 = vpop.permute.xlu0 %1289
        %1291 = vrot.lane.b32.xlu0 %v1011, 112
        %v1292 = vpop.permute.xlu0 %1291
        %v1296 = vadd.f32 %v1258, %v1288
        %v1297 = vadd.f32 %v1259, %v1290
        %v1298 = vadd.f32 %v1260, %v1292
        %v1302 = vrot.slane %v1296, 6
        %v1303 = vrot.slane %v1297, 6
        %v1304 = vsel %vm1028, %v1302, %v1303
        %v1305 = vrot.slane %v1298, 6
        %v1306 = vsel %vm1028, %v1303, %v1305
        %v1309 = vsel %vm744, %v1304, 0.0
        %v1310 = vsel %vm745, %v1306, 0.0
        %v1311 = vpack.c.bf16 %v1310, %v1309
        %1312 = vrot.lane.b32.xlu0 %v736, 112
        %v1313 = vpop.permute.xlu0 %1312
        %v1315 = vadd.f32 %v1258, %v1313
        %1316 = vrot.lane.b32.xlu0 %v737, 112
        %v1317 = vpop.permute.xlu0 %1316
        %v1319 = vadd.f32 %v1260, %v1313
        %v1320 = vadd.f32 %v1261, %v1317
        %v1321 = vsel %vm750, %v1315, 0.0
        %v1322 = vpack.c.bf16 %v1321, %v1321
        %v1323 = vsel %vm750, %v1319, 0.0
        %v1324 = vsel %vm754, %v1320, 0.0
        %v1325 = vpack.c.bf16 %v1324, %v1323
        %v1327 = vunpack.c.l.b16 %v1311
        %v1328 = vunpack.c.h.b16 %v1311
        %v1329 = vpack.c.b16 %v1327, %v1327
        %v1330 = vpack.c.b16 %v1328, %v1328
        %1333 = vst.msk [vmem:[#allocation2 + $0xc] sm:$0xf] %vm764, %v1329
        %1334 = vst.msk [vmem:[#allocation2 + $0x10] sm:$0xf] %vm764, %v1330
        %v1336 = vunpack.c.l.b16 %v1322
        %v1337 = vpack.c.b16 %v1336, %v1336
        %v1338 = vrot.slane %v1337, 7
        %1340 = vst.msk [vmem:[#allocation2 + $0x8] sm:$0xe] %vm772, %v1338
        %v1342 = vunpack.c.l.b16 %v1325
        %v1343 = vunpack.c.h.b16 %v1325
        %v1344 = vpack.c.b16 %v1342, %v1342
        %v1345 = vpack.c.b16 %v1343, %v1343
        %v1346 = vrot.slane %v1344, 7
        %v1347 = vrot.slane %v1346, 4
        %v1348 = vrot.slane %v1345, 7
        %v1349 = vsel %vm781, %v1347, %v1348
        %1351 = vst.msk [vmem:[#allocation2 + $0x14] sm:$0x7] %vm787, %v1349
        %v1352 = vrot.slane %v1329, 5
        %v1353 = vrot.slane %v1352, 4
        %v1354 = vrot.slane %v1330, 5
        %v1355 = vsel %vm791, %v1353, %v1354
        %v1356 = vrot.slane %v1354, 4
        %1357 = vrot.lane.b32.xlu0 %v1352, 8
        %v1358 = vpop.permute.xlu0 %1357
        %1359 = vrot.lane.b32.xlu0 %v1355, 8
        %v1360 = vpop.permute.xlu0 %1359
        %1361 = vrot.lane.b32.xlu0 %v1356, 8
        %v1362 = vpop.permute.xlu0 %1361
        %1366 = vst.msk [vmem:[#allocation2 + $0x8] sm:$0x8] %vm806, %v1358
        %1367 = vst.msk [vmem:[#allocation2 + $0xc] sm:$0xf] %vm808, %v1360
        %1368 = vst.msk [vmem:[#allocation2 + $0x10] sm:$0x7] %vm810, %v1362
        %1369 = vrot.lane.b32.xlu0 %v1337, 8
        %v1370 = vpop.permute.xlu0 %1369
        %1372 = vst.msk [vmem:[#allocation2 + $0x8] sm:$0x7] %vm810, %v1370
        %1373 = vrot.lane.b32.xlu0 %v1344, 8
        %v1374 = vpop.permute.xlu0 %1373
        %1375 = vrot.lane.b32.xlu0 %v1345, 8
        %v1376 = vpop.permute.xlu0 %1375
        %1379 = vst.msk [vmem:[#allocation2 + $0x10] sm:$0x8] %vm806, %v1374
        %1380 = vst.msk [vmem:[#allocation2 + $0x14] sm:$0x3] %vm823, %v1376
        %v1381 = vrot.slane %v1329, 6
        %v1382 = vrot.slane %v1381, 4
        %v1383 = vrot.slane %v1330, 6
        %v1384 = vsel %vm827, %v1382, %v1383
        %v1385 = vrot.slane %v1383, 4
        %1386 = vrot.lane.b32.xlu0 %v1381, 16
        %v1387 = vpop.permute.xlu0 %1386
        %1388 = vrot.lane.b32.xlu0 %v1384, 16
        %v1389 = vpop.permute.xlu0 %1388
        %1390 = vrot.lane.b32.xlu0 %v1385, 16
        %v1391 = vpop.permute.xlu0 %1390
        %1395 = vst.msk [vmem:[#allocation2 + $0x8] sm:$0xc] %vm842, %v1387
        %1396 = vst.msk [vmem:[#allocation2 + $0xc] sm:$0xf] %vm844, %v1389
        %1397 = vst.msk [vmem:[#allocation2 + $0x10] sm:$0x3] %vm846, %v1391
        %v1398 = vrot.slane %v1337, 5
        %v1399 = vrot.slane %v1398, 4
        %1400 = vrot.lane.b32.xlu0 %v1398, 16
        %v1401 = vpop.permute.xlu0 %1400
        %1402 = vrot.lane.b32.xlu0 %v1399, 16
        %v1403 = vpop.permute.xlu0 %1402
        %1406 = vst.msk [vmem:[#allocation2 + $0x4] sm:$0x8] %vm856, %v1401
        %1407 = vst.msk [vmem:[#allocation2 + $0x8] sm:$0x3] %vm846, %v1403
        %v1408 = vrot.slane %v1344, 5
        %v1409 = vrot.slane %v1408, 4
        %v1410 = vrot.slane %v1345, 5
        %v1411 = vsel %vm791, %v1409, %v1410
        %v1412 = vrot.slane %v1410, 4
        %1413 = vrot.lane.b32.xlu0 %v1411, 16
        %v1414 = vpop.permute.xlu0 %1413
        %1415 = vrot.lane.b32.xlu0 %v1412, 16
        %v1416 = vpop.permute.xlu0 %1415
        %1419 = vst.msk [vmem:[#allocation2 + $0x10] sm:$0xc] %vm842, %v1414
        %1420 = vst.msk [vmem:[#allocation2 + $0x14] sm:$0x1] %vm871, %v1416
        %v1421 = vld [vmem:[#allocation2 + $0x8] sm:$0xf]
        %v1422 = vld [vmem:[#allocation2 + $0xc] sm:$0xf]
        %v1423 = vld [vmem:[#allocation2 + $0x10] sm:$0xf]
        %v1424 = vld [vmem:[#allocation2 + $0x14] sm:$0x3]
        %s1425 = scalar_lea.vmem %s6, 24
        %v1426 = vld [vmem:[%s1425] sm:$0xf]
        %v1427 = vld [vmem:[%s1425 + $0x4] sm:$0xf]
        %v1428 = vld [vmem:[%s1425 + $0x8] sm:$0xf]
        %v1429 = vld [vmem:[%s7 + $0x2] sm:$0x1]
        %v1430 = vlaneseq
        %v1431 = vshrl.u32 %v1430, 7
        %v1432 = vsub.s32 0, %v1431
        %v1433 = vrot.slane %v1429, %v1432
        %v1438 = vunpack.c.l.b16 %v1421
        %v1439 = vunpack.c.l.b16 %v1422
        %v1440 = vunpack.c.l.b16 %v1423
        %v1441 = vunpack.c.l.b16 %v1424
        %v1442 = vpack.c.b16 %v1439, %v1438
        %v1443 = vpack.c.b16 %v1441, %v1440
        %v1447 = vunpack.c.l.b16 %v1426
        %v1448 = vunpack.c.l.b16 %v1427
        %v1449 = vunpack.c.l.b16 %v1428
        %v1450 = vpack.c.b16 %v1448, %v1447
        %v1451 = vpack.c.b16 %v1449, %v1449
        %v1454 = vsel %vm904, %v1442, 0
        %v1457 = vsel %vm904, %v1443, 0
        %v1460 = vsel %vm911, %v1451, 0
        %1462 = vmatprep.subr.bf16.mxu0 0
        %1463 = vmatpush1.bf16.msra.mxu0 0
        %1464 = vmatprep.subr.bf16.mxu0 0
        %1465 = vmatpush1.bf16.msra.mxu0 0
        %1466 = vmatprep.subr.bf16.mxu0 0
        %1467 = vmatpush1.bf16.msra.mxu0 0
        %1468 = vmatprep.subr.bf16.mxu0 0
        %1469 = vmatpush1.bf16.msra.mxu0 0
        %1470 = vmatprep.subr.bf16.mxu0 0
        %1471 = vmatpush1.bf16.msra.mxu0 0
        %1472 = vmatprep.subr.bf16.mxu0 0
        %1473 = vmatpush1.bf16.msra.mxu0 0
        %1474 = vmatprep.subr.bf16.mxu0 0
        %1475 = vmatpush1.bf16.msra.mxu0 %v1460
        %1476 = vmatprep.subr.bf16.mxu0 0
        %1477 = vmatpush1.bf16.msra.mxu0 %v1450
        %1478 = vmatprep.subr.bf16.mxu0 0
        %1479 = vmatpush2.bf16.msra.mxu0 0
        %1480 = vmatprep.subr.bf16.mxu0 0
        %1481 = vmatpush2.bf16.msra.mxu0 0
        %1482 = vmatprep.subr.bf16.mxu0 0
        %1483 = vmatpush2.bf16.msra.mxu0 0
        %1484 = vmatprep.subr.bf16.mxu0 0
        %1485 = vmatpush2.bf16.msra.mxu0 0
        %1486 = vmatprep.subr.bf16.mxu0 0
        %1487 = vmatpush2.bf16.msra.mxu0 0
        %1488 = vmatprep.subr.bf16.mxu0 0
        %1489 = vmatpush2.bf16.msra.mxu0 0
        %1490 = vmatprep.subr.bf16.mxu0 0
        %1491 = vmatpush2.bf16.msra.mxu0 0
        %1492 = vmatprep.subr.bf16.mxu0 0
        %1493 = vmatpush2.bf16.msra.mxu0 0
        %1494 = vmatprep.mubr.bf16.mxu0 0
        %1495 = vmatmul.mubr.bf16.gmra.mxu0 %v1454
        %v1496 = vpop.f32.mrf.mxu0
        %v1497 = vadd.f32 %v1433, %v1496
        %v1498 = vpop.f32.mrf.mxu0
        %v1499 = vpop.f32.mrf.mxu0
        %v1500 = vadd.f32 %v1433, %v1499
        %v1501 = vpop.f32.mrf.mxu0
        %1502 = vmatprep.mubr.bf16.mxu0 0
        %1503 = vmatmul.mubr.bf16.gmra.mxu0 %v1457
        %v1504 = vpop.f32.mrf.mxu0
        %v1505 = vadd.f32 %v1433, %v1504
        %v1506 = vpop.f32.mrf.mxu0
        %v1507 = vpop.f32.mrf.mxu0
        %v1508 = vpop.f32.mrf.mxu0
        %1509 = vdwg.mxu0
        %v1510 = vmax.f32 %v1497, 0.0
        %v1511 = vmax.f32 %v1500, 0.0
        %v1512 = vmax.f32 %v1505, 0.0
        %v1513 = vld [vmem:[%s8 + $0x2] sm:$0x1]
        %v1514 = vlaneseq
        %v1515 = vshrl.u32 %v1514, 7
        %v1516 = vsub.s32 0, %v1515
        %v1517 = vrot.slane %v1513, %v1516
        %v1518 = vmul.f32 %v1510, %v1517
        %v1519 = vmul.f32 %v1511, %v1517
        %v1520 = vmul.f32 %v1512, %v1517
        %v1521 = vld [vmem:[%s9 + $0x2] sm:$0x1]
        %v1522 = vlaneseq
        %v1523 = vshrl.u32 %v1522, 7
        %v1524 = vsub.s32 0, %v1523
        %v1525 = vrot.slane %v1521, %v1524
        %v1526 = vadd.f32 %v1518, %v1525
        %v1527 = vadd.f32 %v1519, %v1525
        %v1528 = vadd.f32 %v1520, %v1525
        %v1529 = vpack.c.bf16 %v1527, %v1526
        %v1530 = vpack.c.bf16 %v1528, %v1528
        %v1533 = vunpack.c.l.b16 %v1529
        %v1534 = vunpack.c.h.b16 %v1529
        %v1535 = vunpack.c.l.b16 %v1530
        %v1536 = vpack.c.b16 %v1533, %v1533
        %v1537 = vpack.c.b16 %v1534, %v1534
        %v1538 = vpack.c.b16 %v1535, %v1535
        %v1539 = vrot.slane %v1536, 7
        %v1540 = vrot.slane %v1539, 4
        %v1541 = vrot.slane %v1537, 7
        %v1542 = vsel %vm781, %v1540, %v1541
        %v1543 = vrot.slane %v1541, 4
        %v1544 = vrot.slane %v1538, 7
        %v1545 = vsel %vm781, %v1543, %v1544
        %1546 = vrot.lane.b32.xlu0 %v1542, 16
        %v1547 = vpop.permute.xlu0 %1546
        %1548 = vrot.lane.b32.xlu0 %v1545, 16
        %v1549 = vpop.permute.xlu0 %1548
        %1552 = vst.msk [vmem:[#allocation3] sm:$0xf] %vm844, %v1547
        %1553 = vst.msk [vmem:[#allocation3 + $0x4] sm:$0xf] %vm844, %v1549
        %v1554 = vpack.c.bf16 %v666, %v665
        %v1556 = vunpack.c.l.b16 %v1554
        %v1557 = vunpack.c.h.b16 %v1554
        %v1558 = vpack.c.b16 %v1556, %v1556
        %v1559 = vpack.c.b16 %v1557, %v1557
        %vm1562 = vcmask 257216
        %1563 = vst.msk [vmem:[#allocation3] sm:$0xf] %vm1562, %v1558
        %1564 = vst.msk [vmem:[#allocation3 + $0x4] sm:$0xf] %vm1562, %v1559
        %v1565 = vld [vmem:[#allocation3] sm:$0xf]
        %v1566 = vld [vmem:[#allocation3 + $0x4] sm:$0xf]
        %v1567 = vld [vmem:[%s10] sm:$0xf]
        %v1568 = vld [vmem:[%s10 + $0x4] sm:$0xf]
        %v1569 = vld [vmem:[%s10 + $0x8] sm:$0xf]
        %v1570 = vld [vmem:[%s10 + $0xc] sm:$0xf]
        %v1571 = vld [vmem:[%s11] sm:$0x1]
        %v1573 = vlaneseq
        %v1574 = vshrl.u32 %v1573, 7
        %v1575 = vsub.s32 0, %v1574
        %v1576 = vrot.slane %v1571, %v1575
        %v1580 = vunpack.c.l.b16 %v1565
        %v1581 = vunpack.c.l.b16 %v1566
        %v1582 = vpack.c.b16 %v1581, %v1580
        %v1587 = vunpack.c.l.b16 %v1567
        %v1588 = vunpack.c.l.b16 %v1568
        %v1589 = vunpack.c.l.b16 %v1569
        %v1590 = vunpack.c.l.b16 %v1570
        %v1591 = vpack.c.b16 %v1588, %v1587
        %v1592 = vpack.c.b16 %v1590, %v1589
        %vm1595 = vcmask 261120
        %v1597 = vsel %vm1595, %v1582, 0
        %1599 = vmatprep.subr.bf16.mxu0 0
        %1600 = vmatpush1.bf16.msra.mxu0 0
        %1601 = vmatprep.subr.bf16.mxu0 0
        %1602 = vmatpush1.bf16.msra.mxu0 0
        %1603 = vmatprep.subr.bf16.mxu0 0
        %1604 = vmatpush1.bf16.msra.mxu0 0
        %1605 = vmatprep.subr.bf16.mxu0 0
        %1606 = vmatpush1.bf16.msra.mxu0 0
        %1607 = vmatprep.subr.bf16.mxu0 0
        %1608 = vmatpush1.bf16.msra.mxu0 0
        %1609 = vmatprep.subr.bf16.mxu0 0
        %1610 = vmatpush1.bf16.msra.mxu0 0
        %1611 = vmatprep.subr.bf16.mxu0 0
        %1612 = vmatpush1.bf16.msra.mxu0 %v1592
        %1613 = vmatprep.subr.bf16.mxu0 0
        %1614 = vmatpush1.bf16.msra.mxu0 %v1591
        %1615 = vmatprep.subr.bf16.mxu0 0
        %1616 = vmatpush2.bf16.msra.mxu0 0
        %1617 = vmatprep.subr.bf16.mxu0 0
        %1618 = vmatpush2.bf16.msra.mxu0 0
        %1619 = vmatprep.subr.bf16.mxu0 0
        %1620 = vmatpush2.bf16.msra.mxu0 0
        %1621 = vmatprep.subr.bf16.mxu0 0
        %1622 = vmatpush2.bf16.msra.mxu0 0
        %1623 = vmatprep.subr.bf16.mxu0 0
        %1624 = vmatpush2.bf16.msra.mxu0 0
        %1625 = vmatprep.subr.bf16.mxu0 0
        %1626 = vmatpush2.bf16.msra.mxu0 0
        %1627 = vmatprep.subr.bf16.mxu0 0
        %1628 = vmatpush2.bf16.msra.mxu0 0
        %1629 = vmatprep.subr.bf16.mxu0 0
        %1630 = vmatpush2.bf16.msra.mxu0 0
        %1631 = vmatprep.mubr.bf16.mxu0 0
        %1632 = vmatmul.mubr.bf16.gmra.mxu0 %v1597
        %v1633 = vpop.f32.mrf.mxu0
        %v1634 = vadd.f32 %v1576, %v1633
        %v1635 = vpop.f32.mrf.mxu0
        %v1636 = vpop.f32.mrf.mxu0
        %v1637 = vadd.f32 %v1576, %v1636
        %v1638 = vpop.f32.mrf.mxu0
        %1639 = vdwg.mxu0
        %v1640 = vmax.f32 %v1634, 0.0
        %v1641 = vmax.f32 %v1637, 0.0
        %v1642 = vld [vmem:[%s12] sm:$0x1]
        %v1644 = vlaneseq
        %v1645 = vshrl.u32 %v1644, 7
        %v1646 = vsub.s32 0, %v1645
        %v1647 = vrot.slane %v1642, %v1646
        %v1649 = vmul.f32 %v1640, %v1647
        %v1650 = vmul.f32 %v1641, %v1647
        %v1651 = vld [vmem:[%s13] sm:$0x1]
        %v1653 = vlaneseq
        %v1654 = vshrl.u32 %v1653, 7
        %v1655 = vsub.s32 0, %v1654
        %v1656 = vrot.slane %v1651, %v1655
        %v1658 = vadd.f32 %v1649, %v1656
        %v1659 = vadd.f32 %v1650, %v1656
        %v1660 = vpack.c.bf16 %v1659, %v1658
        %v1662 = vunpack.c.l.b16 %v1660
        %v1663 = vunpack.c.h.b16 %v1660
        %v1664 = vpack.c.b16 %v1662, %v1662
        %v1665 = vpack.c.b16 %v1663, %v1663
        %vm1668 = vcmask 257024
        %1669 = vst.msk [vmem:[%s545] sm:$0xf] %vm1668, %v1664
        %1670 = vst.msk [vmem:[%s545 + $0x4] sm:$0xf] %vm1668, %v1665
        %v1671 = vsel %vm744, %v1658, 0.0
        %v1672 = vsel %vm745, %v1659, 0.0
        %v1673 = vsel %vm1595, %v1671, 0.0
        %v1674 = vsel %vm1595, %v1672, 0.0
        %v1675 = vadd.f32 %v1673, %v1674
        %v1676 = vrot.slane %v1675, 4
        %v1677 = vadd.f32 %v1675, %v1676
        %v1678 = vrot.slane %v1677, 2
        %v1679 = vadd.f32 %v1677, %v1678
        %v1680 = vrot.slane %v1679, 1
        %v1681 = vadd.f32 %v1679, %v1680
        %vm1682 = vcmask 253952
        %1683 = vst.msk [vmem:[%s551] sm:$0x1] %vm1682, %v1681
        %s1684 = sand.u32 %s365, 1
        %s1685 = scalar_lea.sflag [#allocation5], %s1684
        %s1686 = sand.u32 %s365, 1
        %s1687 = smul.addr %s1686, 8
        %s1688 = scalar_lea.vmem [#allocation4], %s1687
        %s1689 = sand.u32 %s395, 1
        %s1690 = scalar_lea.sflag [#allocation7], %s1689
        %s1691 = sand.u32 %s395, 1
        %s1692 = scalar_lea.vmem [#allocation6], %s1691
        // Predicated region
        $region77: #{tpu_custom_call.1} parent=75 // pred_check
          %p1693 = pneg %p375
        $region78: #{tpu_custom_call.1} parent=75 // pred_check_branch
          %1695 = sbr.rel (%p1693) target = $region80
        $region79: #{tpu_custom_call.1} parent=75 // pred_region
          %s1696 = smul.u32 2, %s38
          %s1698 = ssub.s32 128, 128
          %1699 = vsyncadd %s1685, %s1698
          %s1700 = smul.addr %s37, 4
          %s1701 = sadd.s32 %s1696, %s1700
          %s1702 = smul.addr %s1701, 64
          %s1703 = scalar_lea.hbm %s14, %s1702
          %s1704 = sshll.u32 %s1688, 4
          %s1705 = int_to_ptr.vmem [resolvable:$true] %s1704
          %1710 = dma.vmem_to_hbm [thread:$0]  %s1705, 128, %s1703, %s1685, 64, 64, 4
        $region80: #{tpu_custom_call.1} parent=75 // pred_fallthru
          _
        // Predicated region
        $region81: #{tpu_custom_call.1} parent=75 // pred_check
          %p1711 = pneg %p405
        $region82: #{tpu_custom_call.1} parent=75 // pred_check_branch
          %1713 = sbr.rel (%p1711) target = $region84
        $region83: #{tpu_custom_call.1} parent=75 // pred_region
          %s1714 = smul.u32 %s37, 2
          %s1715 = sadd.s32 %s1714, %s38
          %s1717 = ssub.s32 16, 16
          %1718 = vsyncadd %s1690, %s1717
          %s1719 = smul.addr %s1715, 16
          %s1720 = scalar_lea.hbm %s15, %s1719
          %s1722 = sshll.u32 %s1692, 4
          %s1723 = int_to_ptr.vmem [resolvable:$true] %s1722
          %1725 = dma.vmem_to_hbm [thread:$0]  %s1723, 16, %s1720, %s1690
        $region84: #{tpu_custom_call.1} parent=75 // pred_fallthru
          _
      $region76: #{tpu_custom_call.1} parent=5 // pred_fallthru
        _
      %p1726 = scmp.le.s32.totalorder 2, %s28
      // Predicated region
      $region85: #{tpu_custom_call.1} parent=5 // pred_check
        %p1727 = pneg %p1726
      $region86: #{tpu_custom_call.1} parent=5 // pred_check_branch
        %1729 = sbr.rel (%p1727) target = $region88
      $region87: #{tpu_custom_call.1} parent=5 // pred_region
        %s1730 = ssub.s32 %s28, 2
        // Predicated region
        $region89: #{tpu_custom_call.1} parent=87 // pred_check
          %p1731 = pneg %p381
        $region90: #{tpu_custom_call.1} parent=87 // pred_check_branch
          %1733 = sbr.rel (%p1731) target = $region92
        $region91: #{tpu_custom_call.1} parent=87 // pred_region
          %s1734 = sand.u32 %s366, 1
          %s1735 = scalar_lea.sflag [#allocation5], %s1734
          %s1736 = sand.u32 %s366, 1
          %s1737 = smul.addr %s1736, 8
          %s1738 = scalar_lea.vmem [#allocation4], %s1737
          %1739 = dma.done %s1735, 128
        $region92: #{tpu_custom_call.1} parent=87 // pred_fallthru
          _
        // Predicated region
        $region93: #{tpu_custom_call.1} parent=87 // pred_check
          %p1740 = pneg %p411
        $region94: #{tpu_custom_call.1} parent=87 // pred_check_branch
          %1742 = sbr.rel (%p1740) target = $region96
        $region95: #{tpu_custom_call.1} parent=87 // pred_region
          %s1743 = sand.u32 %s396, 1
          %s1744 = scalar_lea.sflag [#allocation7], %s1743
          %s1745 = sand.u32 %s396, 1
          %s1746 = scalar_lea.vmem [#allocation6], %s1745
          %1747 = dma.done %s1744, 16
        $region96: #{tpu_custom_call.1} parent=87 // pred_fallthru
          _
      $region88: #{tpu_custom_call.1} parent=5 // pred_fallthru
        _
    $region6: #{tpu_custom_call.1} parent=1 // loop_footer
      %s32 = sadd.s32 1, %s28
    $region7: #{tpu_custom_call.1} parent=1 // loop_footer_branch
      %27 = sbr.rel target = $region3
    $region8: #{tpu_custom_call.1} parent=1 // loop_exit
      _
    %1748 = vsyncpa [#allocation5], 1
    %s1749 = scalar_lea.sflag [#allocation5], 1
    %1750 = vsyncpa %s1749, 1
    %1751 = vsyncpa [#allocation7], 1
    %s1752 = scalar_lea.sflag [#allocation7], 1
    %1753 = vsyncpa %s1752, 1

</llo_original>
